<compile_context>
chip_gen: v7x
topology: tpu7x:2x2x1
jax: 0.10.0
libtpu: 0.0.40
codegen_flags: <defaults>
</compile_context>

<pallas_src>
import math
import functools

import jax
import jax.numpy as jnp
from jax.experimental import pallas as pl
from jax.experimental.pallas import tpu as pltpu


# ------------------------------ fused kernel --------------------------------

def _fused_self_attention_kernel(
    x_ref,        # (N, C)        tokens for this batch element
    patches_ref,  # (Nkv, k^3*C)  non-overlapping conv patches
    qw_ref,       # (C, C)        q weight, transposed (in, out)
    srw_ref,      # (k^3*C, C)    flattened conv weight, transposed
    srb_ref,      # (1, C)
    lng_ref,      # (1, C)
    lnb_ref,      # (1, C)
    kvw_ref,      # (C, 2C)       kv weight, transposed
    projw_ref,    # (C, C)        proj weight, transposed
    projb_ref,    # (1, C)
    out_ref,      # (N, C)
    *, num_heads, head_dim, scale,
):
    x = x_ref[...]                                                     # (N, C)
    C = x.shape[-1]
    D = head_dim

    # ---- q projection (qkv_bias=False -> no bias add) ----------------------
    q = jnp.dot(x, qw_ref[...], preferred_element_type=jnp.float32)   # (N, C)

    # ---- spatial reduction: Conv3d(k=stride=sr) == patch matmul + bias -----
    x_sr = (
        jnp.dot(patches_ref[...], srw_ref[...],
                preferred_element_type=jnp.float32)
        + srb_ref[...]
    )                                                                  # (Nkv, C)

    # ---- LayerNorm (PyTorch eps = 1e-5) -------------------------------------
    mean = jnp.mean(x_sr, axis=-1, keepdims=True)
    xc = x_sr - mean
    var = jnp.mean(xc * xc, axis=-1, keepdims=True)
    x_ln = xc * jax.lax.rsqrt(var + 1e-5) * lng_ref[...] + lnb_ref[...]

    # ---- key/value projection (qkv_bias=False) ------------------------------
    kv = jnp.dot(x_ln, kvw_ref[...], preferred_element_type=jnp.float32)  # (Nkv, 2C)
    k = kv[:, :C]
    v = kv[:, C:]

    # ---- per-head attention; output projection folded into the head loop ----
    pw = projw_ref[...]                                                # (C, C)
    out_acc = jnp.zeros(q.shape, jnp.float32)
    for h in range(num_heads):                                         # unrolled
        lo, hi = h * D, (h + 1) * D
        qh = q[:, lo:hi]                                               # (N, D)
        kh = k[:, lo:hi]                                               # (Nkv, D)
        vh = v[:, lo:hi]                                               # (Nkv, D)
        # scores: contract over D directly, no explicit transpose of K
        s = jax.lax.dot_general(
            qh, kh, (((1,), (1,)), ((), ())),
            preferred_element_type=jnp.float32) * scale                # (N, Nkv)
        m = jnp.max(s, axis=-1, keepdims=True)
        p = jnp.exp(s - m)
        p = p * pl.reciprocal(jnp.sum(p, axis=-1, keepdims=True))
        oh = jnp.dot(p, vh, preferred_element_type=jnp.float32)        # (N, D)
        # fold proj: out += o_h @ proj_w_rows[h]
        out_acc = out_acc + jnp.dot(oh, pw[lo:hi, :],
                                    preferred_element_type=jnp.float32)
    out_ref[...] = out_acc + projb_ref[...]


# ----------------------------- forward wrapper -------------------------------

def self_attention_forward(x, params, *, num_heads, sr_ratio):
    B, N, C = x.shape
    H = num_heads
    D = C // H
    n = round(N ** (1.0 / 3.0))          # cube_root(N)
    k = sr_ratio
    n2 = n // k
    Nkv = n2 ** 3
    K3C = (k ** 3) * C

    xf = x.astype(jnp.float32)

    # Non-overlapping k^3 patch extraction taken directly from the (B, N, C)
    # token layout (one relayout; NCDHW conv semantics preserved by matching
    # the weight flattening order (kz, ky, kx, C_in)).
    # TODO(synk): fuse this patch gather into the kernel via an Element-indexed
    # BlockSpec to avoid the single HBM relayout of x.
    patches = (
        xf.reshape(B, n2, k, n2, k, n2, k, C)
          .transpose(0, 1, 3, 5, 2, 4, 6, 7)     # (B, z2, y2, x2, dz, dy, dx, C)
          .reshape(B, Nkv, K3C)
    )

    # Weight re-layouts (tiny, done once).
    qw = params["q_w"].T.astype(jnp.float32)                          # (C, C)
    srw = (params["sr_w"].transpose(0, 2, 3, 4, 1)                    # (C, kz, ky, kx, Cin)
           .reshape(C, K3C).T.astype(jnp.float32))                    # (K3C, C)
    srb = params["sr_b"].reshape(1, C).astype(jnp.float32)
    lng = params["ln_g"].reshape(1, C).astype(jnp.float32)
    lnb = params["ln_b"].reshape(1, C).astype(jnp.float32)
    kvw = params["kv_w"].T.astype(jnp.float32)                        # (C, 2C)
    projw = params["proj_w"].T.astype(jnp.float32)                    # (C, C)
    projb = params["proj_b"].reshape(1, C).astype(jnp.float32)

    scale = 1.0 / math.sqrt(H)        # PyTorch quirk: / sqrt(num_heads)

    kern = functools.partial(_fused_self_attention_kernel,
                             num_heads=H, head_dim=D, scale=scale)

    def rep(shape):
        return pl.BlockSpec(shape, lambda b, _s=shape: (0,) * len(_s))

    return pl.pallas_call(
        kern,
        out_shape=jax.ShapeDtypeStruct((B, N, C), jnp.float32),
        grid=(B,),
        in_specs=[
            pl.BlockSpec((None, N, C), lambda b: (b, 0, 0)),      # x
            pl.BlockSpec((None, Nkv, K3C), lambda b: (b, 0, 0)),  # patches
            rep((C, C)),        # q_w^T
            rep((K3C, C)),      # sr_w flattened^T
            rep((1, C)),        # sr_b
            rep((1, C)),        # ln gamma
            rep((1, C)),        # ln beta
            rep((C, 2 * C)),    # kv_w^T
            rep((C, C)),        # proj_w^T
            rep((1, C)),        # proj_b
        ],
        out_specs=pl.BlockSpec((None, N, C), lambda b: (b, 0, 0)),
        compiler_params=pltpu.CompilerParams(
            dimension_semantics=("parallel",)),
    )(xf, patches, qw, srw, srb, lng, lnb, kvw, projw, projb)


# ------------------------ pure-JAX reference (check) -------------------------

def self_attention_reference(x, params, *, num_heads, sr_ratio):
    B, N, C = x.shape
    H, D = num_heads, C // num_heads
    n = round(N ** (1.0 / 3.0))
    q = (x @ params["q_w"].T).reshape(B, N, H, D).transpose(0, 2, 1, 3)
    x_ = x.transpose(0, 2, 1).reshape(B, C, n, n, n)
    x_sr = jax.lax.conv_general_dilated(
        x_, params["sr_w"], window_strides=(sr_ratio,) * 3, padding="VALID",
        dimension_numbers=("NCDHW", "OIDHW", "NCDHW"),
    ) + params["sr_b"].reshape(1, C, 1, 1, 1)
    x_sr = x_sr.reshape(B, C, -1).transpose(0, 2, 1)
    mean = x_sr.mean(-1, keepdims=True)
    var = ((x_sr - mean) ** 2).mean(-1, keepdims=True)
    x_ln = (x_sr - mean) / jnp.sqrt(var + 1e-5) * params["ln_g"] + params["ln_b"]
    Nkv = x_ln.shape[1]
    kv = (x_ln @ params["kv_w"].T).reshape(B, Nkv, 2, H, D).transpose(2, 0, 3, 1, 4)
    kk, vv = kv[0], kv[1]
    s = (q @ kk.transpose(0, 1, 3, 2)) / math.sqrt(H)
    p = jax.nn.softmax(s, axis=-1)
    o = (p @ vv).transpose(0, 2, 1, 3).reshape(B, N, C)
    return o @ params["proj_w"].T + params["proj_b"]


# ----------------------------------- main ------------------------------------

if __name__ == "__main__":
    # small shapes consistent with the module: embed_dim=32, num_heads=4, sr_ratio=2
    B, C, H, SR = 2, 32, 4, 2
    n = 4                      # cube side -> N = 64 (perfect cube, divisible by sr)
    N = n ** 3

    key = jax.random.PRNGKey(0)
    ks = jax.random.split(key, 8)

    def init(k, shape, scale=0.05):
        return scale * jax.random.normal(k, shape, jnp.float32)

    params = {
        "q_w": init(ks[0], (C, C)),            # nn.Linear weight (out, in), no bias
        "kv_w": init(ks[1], (2 * C, C)),       # no bias
        "sr_w": init(ks[2], (C, C, SR, SR, SR)),
        "sr_b": init(ks[3], (C,)),
        "ln_g": jnp.ones((C,), jnp.float32),
        "ln_b": jnp.zeros((C,), jnp.float32),
        "proj_w": init(ks[4], (C, C)),
        "proj_b": init(ks[5], (C,)),
    }
    x = jax.random.normal(ks[6], (B, N, C), jnp.float32)

    out = self_attention_forward(x, params, num_heads=H, sr_ratio=SR)
    out = jax.block_until_ready(out)

    ref = self_attention_reference(x, params, num_heads=H, sr_ratio=SR)
    assert out.shape == (B, N, C)
    assert jnp.allclose(out, ref, atol=1e-4, rtol=1e-4), "mismatch vs reference"

    print("KERNEL_OK")
</pallas_src>

<mosaic_0001>
module attributes {stable_mosaic.version = 11 : i64} {
  func.func @_fused_self_attention_kernel(%arg0: i32, %arg1: memref<1x64x32xf32, #tpu.memory_space<vmem>>, %arg2: memref<1x8x256xf32, #tpu.memory_space<vmem>>, %arg3: memref<32x32xf32, #tpu.memory_space<vmem>>, %arg4: memref<256x32xf32, #tpu.memory_space<vmem>>, %arg5: memref<1x32xf32, #tpu.memory_space<vmem>>, %arg6: memref<1x32xf32, #tpu.memory_space<vmem>>, %arg7: memref<1x32xf32, #tpu.memory_space<vmem>>, %arg8: memref<32x64xf32, #tpu.memory_space<vmem>>, %arg9: memref<32x32xf32, #tpu.memory_space<vmem>>, %arg10: memref<1x32xf32, #tpu.memory_space<vmem>>, %arg11: memref<1x64x32xf32, #tpu.memory_space<vmem>>) attributes {dimension_semantics = [#tpu.dimension_semantics<parallel>], iteration_bounds = array<i64: 2>, scalar_prefetch = 0 : i64, scratch_operands = 0 : i64, tpu.core_type = #tpu.core_type<tc>, window_params = [{transform_indices = @transform_0, window_bounds = array<i64: 1, 64, 32>}, {transform_indices = @transform_1, window_bounds = array<i64: 1, 8, 256>}, {pipeline_mode = #tpu.pipeline_mode<synchronous>, transform_indices = @transform_2, window_bounds = array<i64: 32, 32>}, {pipeline_mode = #tpu.pipeline_mode<synchronous>, transform_indices = @transform_3, window_bounds = array<i64: 256, 32>}, {pipeline_mode = #tpu.pipeline_mode<synchronous>, transform_indices = @transform_4, window_bounds = array<i64: 1, 32>}, {pipeline_mode = #tpu.pipeline_mode<synchronous>, transform_indices = @transform_5, window_bounds = array<i64: 1, 32>}, {pipeline_mode = #tpu.pipeline_mode<synchronous>, transform_indices = @transform_6, window_bounds = array<i64: 1, 32>}, {pipeline_mode = #tpu.pipeline_mode<synchronous>, transform_indices = @transform_7, window_bounds = array<i64: 32, 64>}, {pipeline_mode = #tpu.pipeline_mode<synchronous>, transform_indices = @transform_8, window_bounds = array<i64: 32, 32>}, {pipeline_mode = #tpu.pipeline_mode<synchronous>, transform_indices = @transform_9, window_bounds = array<i64: 1, 32>}, {transform_indices = @transform_10, window_bounds = array<i64: 1, 64, 32>}]} {
    %c0 = arith.constant 0 : index
    %c0_0 = arith.constant 0 : index
    %c0_1 = arith.constant 0 : index
    %0 = vector.load %arg1[%c0, %c0_0, %c0_1] : memref<1x64x32xf32, #tpu.memory_space<vmem>>, vector<1x64x32xf32>
    %1 = vector.shape_cast %0 : vector<1x64x32xf32> to vector<64x32xf32>
    %c0_2 = arith.constant 0 : index
    %c0_3 = arith.constant 0 : index
    %2 = vector.load %arg3[%c0_2, %c0_3] : memref<32x32xf32, #tpu.memory_space<vmem>>, vector<32x32xf32>
    %cst = arith.constant dense<0.000000e+00> : vector<64x32xf32>
    %3 = tpu.matmul %1, %2, %cst {dimension_numbers = #tpu.dot_dimension_numbers<[1], [0], [0], [1], [0, 0, 1, 1], [], []>} : vector<64x32xf32>, vector<32x32xf32>, vector<64x32xf32> -> vector<64x32xf32>
    %c0_4 = arith.constant 0 : index
    %c0_5 = arith.constant 0 : index
    %c0_6 = arith.constant 0 : index
    %4 = vector.load %arg2[%c0_4, %c0_5, %c0_6] : memref<1x8x256xf32, #tpu.memory_space<vmem>>, vector<1x8x256xf32>
    %5 = vector.shape_cast %4 : vector<1x8x256xf32> to vector<8x256xf32>
    %c0_7 = arith.constant 0 : index
    %c0_8 = arith.constant 0 : index
    %6 = vector.load %arg4[%c0_7, %c0_8] : memref<256x32xf32, #tpu.memory_space<vmem>>, vector<256x32xf32>
    %cst_9 = arith.constant dense<0.000000e+00> : vector<8x32xf32>
    %7 = tpu.matmul %5, %6, %cst_9 {dimension_numbers = #tpu.dot_dimension_numbers<[1], [0], [0], [1], [0, 0, 1, 1], [], []>} : vector<8x256xf32>, vector<256x32xf32>, vector<8x32xf32> -> vector<8x32xf32>
    %c0_10 = arith.constant 0 : index
    %c0_11 = arith.constant 0 : index
    %8 = vector.load %arg5[%c0_10, %c0_11] : memref<1x32xf32, #tpu.memory_space<vmem>>, vector<1x32xf32>
    %9 = vector.broadcast %8 : vector<1x32xf32> to vector<8x32xf32>
    %10 = arith.addf %7, %9 : vector<8x32xf32>
    %cst_12 = arith.constant dense<0.000000e+00> : vector<8xf32>
    %11 = vector.multi_reduction <add>, %10, %cst_12 [1] : vector<8x32xf32> to vector<8xf32>
    %12 = vector.shape_cast %11 : vector<8xf32> to vector<8x1xf32>
    %cst_13 = arith.constant 3.200000e+01 : f32
    %13 = vector.broadcast %cst_13 : f32 to vector<8x1xf32>
    %14 = arith.divf %12, %13 : vector<8x1xf32>
    %15 = vector.broadcast %14 : vector<8x1xf32> to vector<8x32xf32>
    %16 = arith.subf %10, %15 : vector<8x32xf32>
    %17 = arith.mulf %16, %16 : vector<8x32xf32>
    %cst_14 = arith.constant dense<0.000000e+00> : vector<8xf32>
    %18 = vector.multi_reduction <add>, %17, %cst_14 [1] : vector<8x32xf32> to vector<8xf32>
    %19 = vector.shape_cast %18 : vector<8xf32> to vector<8x1xf32>
    %cst_15 = arith.constant 3.200000e+01 : f32
    %20 = vector.broadcast %cst_15 : f32 to vector<8x1xf32>
    %21 = arith.divf %19, %20 : vector<8x1xf32>
    %cst_16 = arith.constant 9.99999974E-6 : f32
    %22 = vector.broadcast %cst_16 : f32 to vector<8x1xf32>
    %23 = arith.addf %21, %22 : vector<8x1xf32>
    %24 = math.rsqrt %23 : vector<8x1xf32>
    %25 = vector.broadcast %24 : vector<8x1xf32> to vector<8x32xf32>
    %26 = arith.mulf %16, %25 : vector<8x32xf32>
    %c0_17 = arith.constant 0 : index
    %c0_18 = arith.constant 0 : index
    %27 = vector.load %arg6[%c0_17, %c0_18] : memref<1x32xf32, #tpu.memory_space<vmem>>, vector<1x32xf32>
    %28 = vector.broadcast %27 : vector<1x32xf32> to vector<8x32xf32>
    %29 = arith.mulf %26, %28 : vector<8x32xf32>
    %c0_19 = arith.constant 0 : index
    %c0_20 = arith.constant 0 : index
    %30 = vector.load %arg7[%c0_19, %c0_20] : memref<1x32xf32, #tpu.memory_space<vmem>>, vector<1x32xf32>
    %31 = vector.broadcast %30 : vector<1x32xf32> to vector<8x32xf32>
    %32 = arith.addf %29, %31 : vector<8x32xf32>
    %c0_21 = arith.constant 0 : index
    %c0_22 = arith.constant 0 : index
    %33 = vector.load %arg8[%c0_21, %c0_22] : memref<32x64xf32, #tpu.memory_space<vmem>>, vector<32x64xf32>
    %cst_23 = arith.constant dense<0.000000e+00> : vector<8x64xf32>
    %34 = tpu.matmul %32, %33, %cst_23 {dimension_numbers = #tpu.dot_dimension_numbers<[1], [0], [0], [1], [0, 0, 1, 1], [], []>} : vector<8x32xf32>, vector<32x64xf32>, vector<8x64xf32> -> vector<8x64xf32>
    %35 = vector.extract_strided_slice %34 {offsets = [0, 0], sizes = [8, 32], strides = [1, 1]} : vector<8x64xf32> to vector<8x32xf32>
    %36 = vector.extract_strided_slice %34 {offsets = [0, 32], sizes = [8, 32], strides = [1, 1]} : vector<8x64xf32> to vector<8x32xf32>
    %c0_24 = arith.constant 0 : index
    %c0_25 = arith.constant 0 : index
    %37 = vector.load %arg9[%c0_24, %c0_25] : memref<32x32xf32, #tpu.memory_space<vmem>>, vector<32x32xf32>
    %cst_26 = arith.constant 0.000000e+00 : f32
    %38 = vector.broadcast %cst_26 : f32 to vector<64x32xf32>
    %39 = vector.extract_strided_slice %3 {offsets = [0, 0], sizes = [64, 8], strides = [1, 1]} : vector<64x32xf32> to vector<64x8xf32>
    %40 = vector.extract_strided_slice %35 {offsets = [0, 0], sizes = [8, 8], strides = [1, 1]} : vector<8x32xf32> to vector<8x8xf32>
    %41 = vector.extract_strided_slice %36 {offsets = [0, 0], sizes = [8, 8], strides = [1, 1]} : vector<8x32xf32> to vector<8x8xf32>
    %cst_27 = arith.constant dense<0.000000e+00> : vector<64x8xf32>
    %42 = tpu.matmul %39, %40, %cst_27 {dimension_numbers = #tpu.dot_dimension_numbers<[1], [1], [0], [0], [0, 0, 1, 0], [], []>} : vector<64x8xf32>, vector<8x8xf32>, vector<64x8xf32> -> vector<64x8xf32>
    %cst_28 = arith.constant 5.000000e-01 : f32
    %43 = vector.broadcast %cst_28 : f32 to vector<64x8xf32>
    %44 = arith.mulf %42, %43 : vector<64x8xf32>
    %cst_29 = arith.constant dense<0xFF800000> : vector<64xf32>
    %45 = vector.multi_reduction <maximumf>, %44, %cst_29 [1] : vector<64x8xf32> to vector<64xf32>
    %46 = vector.shape_cast %45 : vector<64xf32> to vector<64x1xf32>
    %47 = vector.broadcast %46 : vector<64x1xf32> to vector<64x8xf32>
    %48 = arith.subf %44, %47 : vector<64x8xf32>
    %49 = math.exp %48 : vector<64x8xf32>
    %cst_30 = arith.constant dense<0.000000e+00> : vector<64xf32>
    %50 = vector.multi_reduction <add>, %49, %cst_30 [1] : vector<64x8xf32> to vector<64xf32>
    %51 = vector.shape_cast %50 : vector<64xf32> to vector<64x1xf32>
    %52 = tpu.reciprocal %51 : vector<64x1xf32> -> vector<64x1xf32>
    %53 = vector.broadcast %52 : vector<64x1xf32> to vector<64x8xf32>
    %54 = arith.mulf %49, %53 : vector<64x8xf32>
    %cst_31 = arith.constant dense<0.000000e+00> : vector<64x8xf32>
    %55 = tpu.matmul %54, %41, %cst_31 {dimension_numbers = #tpu.dot_dimension_numbers<[1], [0], [0], [1], [0, 0, 1, 1], [], []>} : vector<64x8xf32>, vector<8x8xf32>, vector<64x8xf32> -> vector<64x8xf32>
    %56 = vector.extract_strided_slice %37 {offsets = [0, 0], sizes = [8, 32], strides = [1, 1]} : vector<32x32xf32> to vector<8x32xf32>
    %cst_32 = arith.constant dense<0.000000e+00> : vector<64x32xf32>
    %57 = tpu.matmul %55, %56, %cst_32 {dimension_numbers = #tpu.dot_dimension_numbers<[1], [0], [0], [1], [0, 0, 1, 1], [], []>} : vector<64x8xf32>, vector<8x32xf32>, vector<64x32xf32> -> vector<64x32xf32>
    %58 = arith.addf %38, %57 : vector<64x32xf32>
    %59 = vector.extract_strided_slice %3 {offsets = [0, 8], sizes = [64, 8], strides = [1, 1]} : vector<64x32xf32> to vector<64x8xf32>
    %60 = vector.extract_strided_slice %35 {offsets = [0, 8], sizes = [8, 8], strides = [1, 1]} : vector<8x32xf32> to vector<8x8xf32>
    %61 = vector.extract_strided_slice %36 {offsets = [0, 8], sizes = [8, 8], strides = [1, 1]} : vector<8x32xf32> to vector<8x8xf32>
    %cst_33 = arith.constant dense<0.000000e+00> : vector<64x8xf32>
    %62 = tpu.matmul %59, %60, %cst_33 {dimension_numbers = #tpu.dot_dimension_numbers<[1], [1], [0], [0], [0, 0, 1, 0], [], []>} : vector<64x8xf32>, vector<8x8xf32>, vector<64x8xf32> -> vector<64x8xf32>
    %cst_34 = arith.constant 5.000000e-01 : f32
    %63 = vector.broadcast %cst_34 : f32 to vector<64x8xf32>
    %64 = arith.mulf %62, %63 : vector<64x8xf32>
    %cst_35 = arith.constant dense<0xFF800000> : vector<64xf32>
    %65 = vector.multi_reduction <maximumf>, %64, %cst_35 [1] : vector<64x8xf32> to vector<64xf32>
    %66 = vector.shape_cast %65 : vector<64xf32> to vector<64x1xf32>
    %67 = vector.broadcast %66 : vector<64x1xf32> to vector<64x8xf32>
    %68 = arith.subf %64, %67 : vector<64x8xf32>
    %69 = math.exp %68 : vector<64x8xf32>
    %cst_36 = arith.constant dense<0.000000e+00> : vector<64xf32>
    %70 = vector.multi_reduction <add>, %69, %cst_36 [1] : vector<64x8xf32> to vector<64xf32>
    %71 = vector.shape_cast %70 : vector<64xf32> to vector<64x1xf32>
    %72 = tpu.reciprocal %71 : vector<64x1xf32> -> vector<64x1xf32>
    %73 = vector.broadcast %72 : vector<64x1xf32> to vector<64x8xf32>
    %74 = arith.mulf %69, %73 : vector<64x8xf32>
    %cst_37 = arith.constant dense<0.000000e+00> : vector<64x8xf32>
    %75 = tpu.matmul %74, %61, %cst_37 {dimension_numbers = #tpu.dot_dimension_numbers<[1], [0], [0], [1], [0, 0, 1, 1], [], []>} : vector<64x8xf32>, vector<8x8xf32>, vector<64x8xf32> -> vector<64x8xf32>
    %76 = vector.extract_strided_slice %37 {offsets = [8, 0], sizes = [8, 32], strides = [1, 1]} : vector<32x32xf32> to vector<8x32xf32>
    %cst_38 = arith.constant dense<0.000000e+00> : vector<64x32xf32>
    %77 = tpu.matmul %75, %76, %cst_38 {dimension_numbers = #tpu.dot_dimension_numbers<[1], [0], [0], [1], [0, 0, 1, 1], [], []>} : vector<64x8xf32>, vector<8x32xf32>, vector<64x32xf32> -> vector<64x32xf32>
    %78 = arith.addf %58, %77 : vector<64x32xf32>
    %79 = vector.extract_strided_slice %3 {offsets = [0, 16], sizes = [64, 8], strides = [1, 1]} : vector<64x32xf32> to vector<64x8xf32>
    %80 = vector.extract_strided_slice %35 {offsets = [0, 16], sizes = [8, 8], strides = [1, 1]} : vector<8x32xf32> to vector<8x8xf32>
    %81 = vector.extract_strided_slice %36 {offsets = [0, 16], sizes = [8, 8], strides = [1, 1]} : vector<8x32xf32> to vector<8x8xf32>
    %cst_39 = arith.constant dense<0.000000e+00> : vector<64x8xf32>
    %82 = tpu.matmul %79, %80, %cst_39 {dimension_numbers = #tpu.dot_dimension_numbers<[1], [1], [0], [0], [0, 0, 1, 0], [], []>} : vector<64x8xf32>, vector<8x8xf32>, vector<64x8xf32> -> vector<64x8xf32>
    %cst_40 = arith.constant 5.000000e-01 : f32
    %83 = vector.broadcast %cst_40 : f32 to vector<64x8xf32>
    %84 = arith.mulf %82, %83 : vector<64x8xf32>
    %cst_41 = arith.constant dense<0xFF800000> : vector<64xf32>
    %85 = vector.multi_reduction <maximumf>, %84, %cst_41 [1] : vector<64x8xf32> to vector<64xf32>
    %86 = vector.shape_cast %85 : vector<64xf32> to vector<64x1xf32>
    %87 = vector.broadcast %86 : vector<64x1xf32> to vector<64x8xf32>
    %88 = arith.subf %84, %87 : vector<64x8xf32>
    %89 = math.exp %88 : vector<64x8xf32>
    %cst_42 = arith.constant dense<0.000000e+00> : vector<64xf32>
    %90 = vector.multi_reduction <add>, %89, %cst_42 [1] : vector<64x8xf32> to vector<64xf32>
    %91 = vector.shape_cast %90 : vector<64xf32> to vector<64x1xf32>
    %92 = tpu.reciprocal %91 : vector<64x1xf32> -> vector<64x1xf32>
    %93 = vector.broadcast %92 : vector<64x1xf32> to vector<64x8xf32>
    %94 = arith.mulf %89, %93 : vector<64x8xf32>
    %cst_43 = arith.constant dense<0.000000e+00> : vector<64x8xf32>
    %95 = tpu.matmul %94, %81, %cst_43 {dimension_numbers = #tpu.dot_dimension_numbers<[1], [0], [0], [1], [0, 0, 1, 1], [], []>} : vector<64x8xf32>, vector<8x8xf32>, vector<64x8xf32> -> vector<64x8xf32>
    %96 = vector.extract_strided_slice %37 {offsets = [16, 0], sizes = [8, 32], strides = [1, 1]} : vector<32x32xf32> to vector<8x32xf32>
    %cst_44 = arith.constant dense<0.000000e+00> : vector<64x32xf32>
    %97 = tpu.matmul %95, %96, %cst_44 {dimension_numbers = #tpu.dot_dimension_numbers<[1], [0], [0], [1], [0, 0, 1, 1], [], []>} : vector<64x8xf32>, vector<8x32xf32>, vector<64x32xf32> -> vector<64x32xf32>
    %98 = arith.addf %78, %97 : vector<64x32xf32>
    %99 = vector.extract_strided_slice %3 {offsets = [0, 24], sizes = [64, 8], strides = [1, 1]} : vector<64x32xf32> to vector<64x8xf32>
    %100 = vector.extract_strided_slice %35 {offsets = [0, 24], sizes = [8, 8], strides = [1, 1]} : vector<8x32xf32> to vector<8x8xf32>
    %101 = vector.extract_strided_slice %36 {offsets = [0, 24], sizes = [8, 8], strides = [1, 1]} : vector<8x32xf32> to vector<8x8xf32>
    %cst_45 = arith.constant dense<0.000000e+00> : vector<64x8xf32>
    %102 = tpu.matmul %99, %100, %cst_45 {dimension_numbers = #tpu.dot_dimension_numbers<[1], [1], [0], [0], [0, 0, 1, 0], [], []>} : vector<64x8xf32>, vector<8x8xf32>, vector<64x8xf32> -> vector<64x8xf32>
    %cst_46 = arith.constant 5.000000e-01 : f32
    %103 = vector.broadcast %cst_46 : f32 to vector<64x8xf32>
    %104 = arith.mulf %102, %103 : vector<64x8xf32>
    %cst_47 = arith.constant dense<0xFF800000> : vector<64xf32>
    %105 = vector.multi_reduction <maximumf>, %104, %cst_47 [1] : vector<64x8xf32> to vector<64xf32>
    %106 = vector.shape_cast %105 : vector<64xf32> to vector<64x1xf32>
    %107 = vector.broadcast %106 : vector<64x1xf32> to vector<64x8xf32>
    %108 = arith.subf %104, %107 : vector<64x8xf32>
    %109 = math.exp %108 : vector<64x8xf32>
    %cst_48 = arith.constant dense<0.000000e+00> : vector<64xf32>
    %110 = vector.multi_reduction <add>, %109, %cst_48 [1] : vector<64x8xf32> to vector<64xf32>
    %111 = vector.shape_cast %110 : vector<64xf32> to vector<64x1xf32>
    %112 = tpu.reciprocal %111 : vector<64x1xf32> -> vector<64x1xf32>
    %113 = vector.broadcast %112 : vector<64x1xf32> to vector<64x8xf32>
    %114 = arith.mulf %109, %113 : vector<64x8xf32>
    %cst_49 = arith.constant dense<0.000000e+00> : vector<64x8xf32>
    %115 = tpu.matmul %114, %101, %cst_49 {dimension_numbers = #tpu.dot_dimension_numbers<[1], [0], [0], [1], [0, 0, 1, 1], [], []>} : vector<64x8xf32>, vector<8x8xf32>, vector<64x8xf32> -> vector<64x8xf32>
    %116 = vector.extract_strided_slice %37 {offsets = [24, 0], sizes = [8, 32], strides = [1, 1]} : vector<32x32xf32> to vector<8x32xf32>
    %cst_50 = arith.constant dense<0.000000e+00> : vector<64x32xf32>
    %117 = tpu.matmul %115, %116, %cst_50 {dimension_numbers = #tpu.dot_dimension_numbers<[1], [0], [0], [1], [0, 0, 1, 1], [], []>} : vector<64x8xf32>, vector<8x32xf32>, vector<64x32xf32> -> vector<64x32xf32>
    %118 = arith.addf %98, %117 : vector<64x32xf32>
    %c0_51 = arith.constant 0 : index
    %c0_52 = arith.constant 0 : index
    %119 = vector.load %arg10[%c0_51, %c0_52] : memref<1x32xf32, #tpu.memory_space<vmem>>, vector<1x32xf32>
    %120 = vector.broadcast %119 : vector<1x32xf32> to vector<64x32xf32>
    %121 = arith.addf %118, %120 : vector<64x32xf32>
    %c0_53 = arith.constant 0 : index
    %c0_54 = arith.constant 0 : index
    %c0_55 = arith.constant 0 : index
    %122 = vector.load %arg11[%c0_53, %c0_54, %c0_55] : memref<1x64x32xf32, #tpu.memory_space<vmem>>, vector<1x64x32xf32>
    %123 = vector.shape_cast %122 : vector<1x64x32xf32> to vector<64x32xf32>
    %124 = vector.shape_cast %121 : vector<64x32xf32> to vector<1x64x32xf32>
    tpu.vector_store %arg11[%c0_53, %c0_54, %c0_55], %124 {strides = array<i32>} : memref<1x64x32xf32, #tpu.memory_space<vmem>>, vector<1x64x32xf32>,
    return
  }
  func.func @transform_0(%arg0: i32) -> (i32, i32, i32) {
    %c0_i32 = arith.constant 0 : i32
    %c0_i32_0 = arith.constant 0 : i32
    %c0_i32_1 = arith.constant 0 : i32
    return %arg0, %c0_i32, %c0_i32_0 : i32, i32, i32
  }
  func.func @transform_1(%arg0: i32) -> (i32, i32, i32) {
    %c0_i32 = arith.constant 0 : i32
    %c0_i32_0 = arith.constant 0 : i32
    %c0_i32_1 = arith.constant 0 : i32
    return %arg0, %c0_i32, %c0_i32_0 : i32, i32, i32
  }
  func.func @transform_2(%arg0: i32) -> (i32, i32) {
    %c0_i32 = arith.constant 0 : i32
    %c0_i32_0 = arith.constant 0 : i32
    %c0_i32_1 = arith.constant 0 : i32
    return %c0_i32, %c0_i32_0 : i32, i32
  }
  func.func @transform_3(%arg0: i32) -> (i32, i32) {
    %c0_i32 = arith.constant 0 : i32
    %c0_i32_0 = arith.constant 0 : i32
    %c0_i32_1 = arith.constant 0 : i32
    return %c0_i32, %c0_i32_0 : i32, i32
  }
  func.func @transform_4(%arg0: i32) -> (i32, i32) {
    %c0_i32 = arith.constant 0 : i32
    %c0_i32_0 = arith.constant 0 : i32
    %c0_i32_1 = arith.constant 0 : i32
    return %c0_i32, %c0_i32_0 : i32, i32
  }
  func.func @transform_5(%arg0: i32) -> (i32, i32) {
    %c0_i32 = arith.constant 0 : i32
    %c0_i32_0 = arith.constant 0 : i32
    %c0_i32_1 = arith.constant 0 : i32
    return %c0_i32, %c0_i32_0 : i32, i32
  }
  func.func @transform_6(%arg0: i32) -> (i32, i32) {
    %c0_i32 = arith.constant 0 : i32
    %c0_i32_0 = arith.constant 0 : i32
    %c0_i32_1 = arith.constant 0 : i32
    return %c0_i32, %c0_i32_0 : i32, i32
  }
  func.func @transform_7(%arg0: i32) -> (i32, i32) {
    %c0_i32 = arith.constant 0 : i32
    %c0_i32_0 = arith.constant 0 : i32
    %c0_i32_1 = arith.constant 0 : i32
    return %c0_i32, %c0_i32_0 : i32, i32
  }
  func.func @transform_8(%arg0: i32) -> (i32, i32) {
    %c0_i32 = arith.constant 0 : i32
    %c0_i32_0 = arith.constant 0 : i32
    %c0_i32_1 = arith.constant 0 : i32
    return %c0_i32, %c0_i32_0 : i32, i32
  }
  func.func @transform_9(%arg0: i32) -> (i32, i32) {
    %c0_i32 = arith.constant 0 : i32
    %c0_i32_0 = arith.constant 0 : i32
    %c0_i32_1 = arith.constant 0 : i32
    return %c0_i32, %c0_i32_0 : i32, i32
  }
  func.func @transform_10(%arg0: i32) -> (i32, i32, i32) {
    %c0_i32 = arith.constant 0 : i32
    %c0_i32_0 = arith.constant 0 : i32
    %c0_i32_1 = arith.constant 0 : i32
    return %arg0, %c0_i32, %c0_i32_0 : i32, i32, i32
  }
}

</mosaic_0001>

<llo_original>
// kernel: tpu_custom_call.1
$region0: #{tpu_custom_call.1}
  #allocation0 [shape = 'u32[]', space=smem, size = 0x4, offset = 0x4, fixed_abs, tag = 'smem constant byte address 0x4 - core index']
  #allocation1 [shape = 'u32[144,128]{1,0:T(1,128)}', space=vmem, size = 0x12000, scoped, tag = 'internal scratch']
  %s0 = inlined_call_operand.vmem [shape: f32[2,64,32], index: 0, kind: input, shape index: {}]
  %s1 = inlined_call_operand.vmem [shape: f32[2,8,256], index: 1, kind: input, shape index: {}]
  %s2 = inlined_call_operand.vmem [shape: f32[32,32], index: 2, kind: input, shape index: {}]
  %s3 = inlined_call_operand.vmem [shape: f32[256,32], index: 3, kind: input, shape index: {}]
  %s4 = inlined_call_operand.vmem [shape: f32[1,32], index: 4, kind: input, shape index: {}]
  %s5 = inlined_call_operand.vmem [shape: f32[1,32], index: 5, kind: input, shape index: {}]
  %s6 = inlined_call_operand.vmem [shape: f32[1,32], index: 6, kind: input, shape index: {}]
  %s7 = inlined_call_operand.vmem [shape: f32[32,64], index: 7, kind: input, shape index: {}]
  %s8 = inlined_call_operand.vmem [shape: f32[32,32], index: 8, kind: input, shape index: {}]
  %s9 = inlined_call_operand.vmem [shape: f32[1,32], index: 9, kind: input, shape index: {}]
  %s10 = inlined_call_operand.vmem [shape: f32[2,64,32], index: 10, kind: output, shape index: {}]
  %s11 = sld [smem:[#allocation0]]
  $region73: #{tpu_custom_call.1} parent=0
    _
  %s13 = ssub.s32 1, %s11
  %s14 = scalar_select 0, %s13, %s11
  loop: start=0, step=1, limit=4
  $region2: #{tpu_custom_call.1} parent=0 // loop_pre_header
    _
  $region3: #{tpu_custom_call.1} parent=0 // loop_header
    %s16 = sphi 0, %s20
    %p17 = scmp.ge.s32.totalorder %s16, 4
    %s26 = sphi 0, %s28
    %s29 = sphi 0, %s26
    %s30 = sphi 0, %s29
    %s46 = sphi 0, %s30
    %s52 = sphi 0, %s54
    %s55 = sphi 0, %s52
    %s56 = sphi 0, %s55
    %s72 = sphi 0, %s56
    %s76 = sphi 0, %s76
    %s78 = sphi 0, %s76
    %s79 = sphi 0, %s78
    %s93 = sphi 0, %s79
    %s97 = sphi 0, %s97
    %s99 = sphi 0, %s97
    %s100 = sphi 0, %s99
    %s114 = sphi 0, %s100
    %s118 = sphi 0, %s118
    %s120 = sphi 0, %s118
    %s121 = sphi 0, %s120
    %s135 = sphi 0, %s121
    %s139 = sphi 0, %s139
    %s141 = sphi 0, %s139
    %s142 = sphi 0, %s141
    %s156 = sphi 0, %s142
    %s160 = sphi 0, %s160
    %s162 = sphi 0, %s160
    %s163 = sphi 0, %s162
    %s177 = sphi 0, %s163
    %s181 = sphi 0, %s181
    %s183 = sphi 0, %s181
    %s184 = sphi 0, %s183
    %s198 = sphi 0, %s184
    %s202 = sphi 0, %s202
    %s204 = sphi 0, %s202
    %s205 = sphi 0, %s204
    %s219 = sphi 0, %s205
    %s223 = sphi 0, %s223
    %s225 = sphi 0, %s223
    %s226 = sphi 0, %s225
    %s240 = sphi 0, %s226
    %s246 = sphi 0, %s248
    %s249 = sphi 0, %s246
    %s250 = sphi 0, %s249
    %s266 = sphi 0, %s250
  $region4: #{tpu_custom_call.1} parent=0 // loop_header_branch
    %19 = sbr.rel (%p17) target = $region8
  $region5: #{tpu_custom_call.1} parent=0 // loop_body
    %s21 = ssub.s32 %s16, 1
    %s22 = ssub.s32 %s16, 2
    %s23 = sadd.s32 %s16, 1
    %s24 = ssub.s32 %s16, %s23
    %p25 = scmp.eq.s32.totalorder %s24, 0
    %s27 = sadd.s32 %s26, 1
    %s28 = scalar_select %p25, %s26, %s27
    %p31 = pneg %p25
    %p32 = scmp.eq.s32.totalorder %s16, 1
    %p33 = por %p31, %p32
    %p34 = scmp.ne.s32.totalorder %s26, %s29
    %p35 = scmp.eq.s32.totalorder %s16, 0
    %p36 = por %p34, %p35
    %p37 = scmp.ne.s32.totalorder %s26, %s29
    %p38 = scmp.eq.s32.totalorder %s21, 1
    %p39 = por %p37, %p38
    %p40 = scmp.ne.s32.totalorder %s29, %s30
    %p41 = scmp.eq.s32.totalorder %s21, 0
    %p42 = por %p40, %p41
    %p43 = scmp.ne.s32.totalorder %s29, %s30
    %p44 = scmp.eq.s32.totalorder %s22, 1
    %p45 = por %p43, %p44
    %p47 = scmp.ne.s32.totalorder %s30, %s46
    %p48 = scmp.eq.s32.totalorder %s22, 0
    %p49 = por %p47, %p48
    %s50 = ssub.s32 %s16, %s23
    %p51 = scmp.eq.s32.totalorder %s50, 0
    %s53 = sadd.s32 %s52, 1
    %s54 = scalar_select %p51, %s52, %s53
    %p57 = pneg %p51
    %p58 = scmp.eq.s32.totalorder %s16, 1
    %p59 = por %p57, %p58
    %p60 = scmp.ne.s32.totalorder %s52, %s55
    %p61 = scmp.eq.s32.totalorder %s16, 0
    %p62 = por %p60, %p61
    %p63 = scmp.ne.s32.totalorder %s52, %s55
    %p64 = scmp.eq.s32.totalorder %s21, 1
    %p65 = por %p63, %p64
    %p66 = scmp.ne.s32.totalorder %s55, %s56
    %p67 = scmp.eq.s32.totalorder %s21, 0
    %p68 = por %p66, %p67
    %p69 = scmp.ne.s32.totalorder %s55, %s56
    %p70 = scmp.eq.s32.totalorder %s22, 1
    %p71 = por %p69, %p70
    %p73 = scmp.ne.s32.totalorder %s56, %s72
    %p74 = scmp.eq.s32.totalorder %s22, 0
    %p75 = por %p73, %p74
    %s77 = sadd.s32 %s76, 1
    %p80 = scmp.eq.s32.totalorder %s16, 1
    %p81 = scmp.ne.s32.totalorder %s76, %s78
    %p82 = scmp.eq.s32.totalorder %s16, 0
    %p83 = por %p81, %p82
    %p84 = scmp.ne.s32.totalorder %s76, %s78
    %p85 = scmp.eq.s32.totalorder %s21, 1
    %p86 = por %p84, %p85
    %p87 = scmp.ne.s32.totalorder %s78, %s79
    %p88 = scmp.eq.s32.totalorder %s21, 0
    %p89 = por %p87, %p88
    %p90 = scmp.ne.s32.totalorder %s78, %s79
    %p91 = scmp.eq.s32.totalorder %s22, 1
    %p92 = por %p90, %p91
    %p94 = scmp.ne.s32.totalorder %s79, %s93
    %p95 = scmp.eq.s32.totalorder %s22, 0
    %p96 = por %p94, %p95
    %s98 = sadd.s32 %s97, 1
    %p101 = scmp.eq.s32.totalorder %s16, 1
    %p102 = scmp.ne.s32.totalorder %s97, %s99
    %p103 = scmp.eq.s32.totalorder %s16, 0
    %p104 = por %p102, %p103
    %p105 = scmp.ne.s32.totalorder %s97, %s99
    %p106 = scmp.eq.s32.totalorder %s21, 1
    %p107 = por %p105, %p106
    %p108 = scmp.ne.s32.totalorder %s99, %s100
    %p109 = scmp.eq.s32.totalorder %s21, 0
    %p110 = por %p108, %p109
    %p111 = scmp.ne.s32.totalorder %s99, %s100
    %p112 = scmp.eq.s32.totalorder %s22, 1
    %p113 = por %p111, %p112
    %p115 = scmp.ne.s32.totalorder %s100, %s114
    %p116 = scmp.eq.s32.totalorder %s22, 0
    %p117 = por %p115, %p116
    %s119 = sadd.s32 %s118, 1
    %p122 = scmp.eq.s32.totalorder %s16, 1
    %p123 = scmp.ne.s32.totalorder %s118, %s120
    %p124 = scmp.eq.s32.totalorder %s16, 0
    %p125 = por %p123, %p124
    %p126 = scmp.ne.s32.totalorder %s118, %s120
    %p127 = scmp.eq.s32.totalorder %s21, 1
    %p128 = por %p126, %p127
    %p129 = scmp.ne.s32.totalorder %s120, %s121
    %p130 = scmp.eq.s32.totalorder %s21, 0
    %p131 = por %p129, %p130
    %p132 = scmp.ne.s32.totalorder %s120, %s121
    %p133 = scmp.eq.s32.totalorder %s22, 1
    %p134 = por %p132, %p133
    %p136 = scmp.ne.s32.totalorder %s121, %s135
    %p137 = scmp.eq.s32.totalorder %s22, 0
    %p138 = por %p136, %p137
    %s140 = sadd.s32 %s139, 1
    %p143 = scmp.eq.s32.totalorder %s16, 1
    %p144 = scmp.ne.s32.totalorder %s139, %s141
    %p145 = scmp.eq.s32.totalorder %s16, 0
    %p146 = por %p144, %p145
    %p147 = scmp.ne.s32.totalorder %s139, %s141
    %p148 = scmp.eq.s32.totalorder %s21, 1
    %p149 = por %p147, %p148
    %p150 = scmp.ne.s32.totalorder %s141, %s142
    %p151 = scmp.eq.s32.totalorder %s21, 0
    %p152 = por %p150, %p151
    %p153 = scmp.ne.s32.totalorder %s141, %s142
    %p154 = scmp.eq.s32.totalorder %s22, 1
    %p155 = por %p153, %p154
    %p157 = scmp.ne.s32.totalorder %s142, %s156
    %p158 = scmp.eq.s32.totalorder %s22, 0
    %p159 = por %p157, %p158
    %s161 = sadd.s32 %s160, 1
    %p164 = scmp.eq.s32.totalorder %s16, 1
    %p165 = scmp.ne.s32.totalorder %s160, %s162
    %p166 = scmp.eq.s32.totalorder %s16, 0
    %p167 = por %p165, %p166
    %p168 = scmp.ne.s32.totalorder %s160, %s162
    %p169 = scmp.eq.s32.totalorder %s21, 1
    %p170 = por %p168, %p169
    %p171 = scmp.ne.s32.totalorder %s162, %s163
    %p172 = scmp.eq.s32.totalorder %s21, 0
    %p173 = por %p171, %p172
    %p174 = scmp.ne.s32.totalorder %s162, %s163
    %p175 = scmp.eq.s32.totalorder %s22, 1
    %p176 = por %p174, %p175
    %p178 = scmp.ne.s32.totalorder %s163, %s177
    %p179 = scmp.eq.s32.totalorder %s22, 0
    %p180 = por %p178, %p179
    %s182 = sadd.s32 %s181, 1
    %p185 = scmp.eq.s32.totalorder %s16, 1
    %p186 = scmp.ne.s32.totalorder %s181, %s183
    %p187 = scmp.eq.s32.totalorder %s16, 0
    %p188 = por %p186, %p187
    %p189 = scmp.ne.s32.totalorder %s181, %s183
    %p190 = scmp.eq.s32.totalorder %s21, 1
    %p191 = por %p189, %p190
    %p192 = scmp.ne.s32.totalorder %s183, %s184
    %p193 = scmp.eq.s32.totalorder %s21, 0
    %p194 = por %p192, %p193
    %p195 = scmp.ne.s32.totalorder %s183, %s184
    %p196 = scmp.eq.s32.totalorder %s22, 1
    %p197 = por %p195, %p196
    %p199 = scmp.ne.s32.totalorder %s184, %s198
    %p200 = scmp.eq.s32.totalorder %s22, 0
    %p201 = por %p199, %p200
    %s203 = sadd.s32 %s202, 1
    %p206 = scmp.eq.s32.totalorder %s16, 1
    %p207 = scmp.ne.s32.totalorder %s202, %s204
    %p208 = scmp.eq.s32.totalorder %s16, 0
    %p209 = por %p207, %p208
    %p210 = scmp.ne.s32.totalorder %s202, %s204
    %p211 = scmp.eq.s32.totalorder %s21, 1
    %p212 = por %p210, %p211
    %p213 = scmp.ne.s32.totalorder %s204, %s205
    %p214 = scmp.eq.s32.totalorder %s21, 0
    %p215 = por %p213, %p214
    %p216 = scmp.ne.s32.totalorder %s204, %s205
    %p217 = scmp.eq.s32.totalorder %s22, 1
    %p218 = por %p216, %p217
    %p220 = scmp.ne.s32.totalorder %s205, %s219
    %p221 = scmp.eq.s32.totalorder %s22, 0
    %p222 = por %p220, %p221
    %s224 = sadd.s32 %s223, 1
    %p227 = scmp.eq.s32.totalorder %s16, 1
    %p228 = scmp.ne.s32.totalorder %s223, %s225
    %p229 = scmp.eq.s32.totalorder %s16, 0
    %p230 = por %p228, %p229
    %p231 = scmp.ne.s32.totalorder %s223, %s225
    %p232 = scmp.eq.s32.totalorder %s21, 1
    %p233 = por %p231, %p232
    %p234 = scmp.ne.s32.totalorder %s225, %s226
    %p235 = scmp.eq.s32.totalorder %s21, 0
    %p236 = por %p234, %p235
    %p237 = scmp.ne.s32.totalorder %s225, %s226
    %p238 = scmp.eq.s32.totalorder %s22, 1
    %p239 = por %p237, %p238
    %p241 = scmp.ne.s32.totalorder %s226, %s240
    %p242 = scmp.eq.s32.totalorder %s22, 0
    %p243 = por %p241, %p242
    %s244 = ssub.s32 %s16, %s23
    %p245 = scmp.eq.s32.totalorder %s244, 0
    %s247 = sadd.s32 %s246, 1
    %s248 = scalar_select %p245, %s246, %s247
    %p251 = pneg %p245
    %p252 = scmp.eq.s32.totalorder %s16, 1
    %p253 = por %p251, %p252
    %p254 = scmp.ne.s32.totalorder %s246, %s249
    %p255 = scmp.eq.s32.totalorder %s16, 0
    %p256 = por %p254, %p255
    %p257 = scmp.ne.s32.totalorder %s246, %s249
    %p258 = scmp.eq.s32.totalorder %s21, 1
    %p259 = por %p257, %p258
    %p260 = scmp.ne.s32.totalorder %s249, %s250
    %p261 = scmp.eq.s32.totalorder %s21, 0
    %p262 = por %p260, %p261
    %p263 = scmp.ne.s32.totalorder %s249, %s250
    %p264 = scmp.eq.s32.totalorder %s22, 1
    %p265 = por %p263, %p264
    %p267 = scmp.ne.s32.totalorder %s250, %s266
    %p268 = scmp.eq.s32.totalorder %s22, 0
    %p269 = por %p267, %p268
    %p270 = scmp.le.s32.totalorder 1, %s16
    %p271 = scmp.lt.s32.totalorder %s16, 3
    %p272 = pnand %p270, %p271
    %p273 = pneg %p272
    // Predicated region
    $region9: #{tpu_custom_call.1} parent=5 // pred_check
      _
    $region10: #{tpu_custom_call.1} parent=5 // pred_check_branch
      %275 = sbr.rel (%p272) target = $region12
    $region11: #{tpu_custom_call.1} parent=5 // pred_region
      %s276 = ssub.s32 %s16, 1
      // Predicated region
      $region13: #{tpu_custom_call.1} parent=11 // pred_check
        %p277 = pneg %p89
      $region14: #{tpu_custom_call.1} parent=11 // pred_check_branch
        %279 = sbr.rel (%p277) target = $region16
      $region15: #{tpu_custom_call.1} parent=11 // pred_region
        _
      $region16: #{tpu_custom_call.1} parent=11 // pred_fallthru
        _
      // Predicated region
      $region17: #{tpu_custom_call.1} parent=11 // pred_check
        %p280 = pneg %p110
      $region18: #{tpu_custom_call.1} parent=11 // pred_check_branch
        %282 = sbr.rel (%p280) target = $region20
      $region19: #{tpu_custom_call.1} parent=11 // pred_region
        _
      $region20: #{tpu_custom_call.1} parent=11 // pred_fallthru
        _
      // Predicated region
      $region21: #{tpu_custom_call.1} parent=11 // pred_check
        %p283 = pneg %p131
      $region22: #{tpu_custom_call.1} parent=11 // pred_check_branch
        %285 = sbr.rel (%p283) target = $region24
      $region23: #{tpu_custom_call.1} parent=11 // pred_region
        _
      $region24: #{tpu_custom_call.1} parent=11 // pred_fallthru
        _
      // Predicated region
      $region25: #{tpu_custom_call.1} parent=11 // pred_check
        %p286 = pneg %p152
      $region26: #{tpu_custom_call.1} parent=11 // pred_check_branch
        %288 = sbr.rel (%p286) target = $region28
      $region27: #{tpu_custom_call.1} parent=11 // pred_region
        _
      $region28: #{tpu_custom_call.1} parent=11 // pred_fallthru
        _
      // Predicated region
      $region29: #{tpu_custom_call.1} parent=11 // pred_check
        %p289 = pneg %p173
      $region30: #{tpu_custom_call.1} parent=11 // pred_check_branch
        %291 = sbr.rel (%p289) target = $region32
      $region31: #{tpu_custom_call.1} parent=11 // pred_region
        _
      $region32: #{tpu_custom_call.1} parent=11 // pred_fallthru
        _
      // Predicated region
      $region33: #{tpu_custom_call.1} parent=11 // pred_check
        %p292 = pneg %p194
      $region34: #{tpu_custom_call.1} parent=11 // pred_check_branch
        %294 = sbr.rel (%p292) target = $region36
      $region35: #{tpu_custom_call.1} parent=11 // pred_region
        _
      $region36: #{tpu_custom_call.1} parent=11 // pred_fallthru
        _
      // Predicated region
      $region37: #{tpu_custom_call.1} parent=11 // pred_check
        %p295 = pneg %p215
      $region38: #{tpu_custom_call.1} parent=11 // pred_check_branch
        %297 = sbr.rel (%p295) target = $region40
      $region39: #{tpu_custom_call.1} parent=11 // pred_region
        _
      $region40: #{tpu_custom_call.1} parent=11 // pred_fallthru
        _
      // Predicated region
      $region41: #{tpu_custom_call.1} parent=11 // pred_check
        %p298 = pneg %p236
      $region42: #{tpu_custom_call.1} parent=11 // pred_check_branch
        %300 = sbr.rel (%p298) target = $region44
      $region43: #{tpu_custom_call.1} parent=11 // pred_region
        _
      $region44: #{tpu_custom_call.1} parent=11 // pred_fallthru
        _
    $region12: #{tpu_custom_call.1} parent=5 // pred_fallthru
      _
    %p301 = scmp.lt.s32.totalorder %s16, 2
    // Predicated region
    $region45: #{tpu_custom_call.1} parent=5 // pred_check
      %p302 = pneg %p301
    $region46: #{tpu_custom_call.1} parent=5 // pred_check_branch
      %304 = sbr.rel (%p302) target = $region48
    $region47: #{tpu_custom_call.1} parent=5 // pred_region
      // Predicated region
      $region49: #{tpu_custom_call.1} parent=47 // pred_check
        %p305 = pneg %p36
      $region50: #{tpu_custom_call.1} parent=47 // pred_check_branch
        %307 = sbr.rel (%p305) target = $region52
      $region51: #{tpu_custom_call.1} parent=47 // pred_region
        %p308 = scmp.lt.s32.totalorder %s16, 1
        %s309 = scalar_select %p308, %s16, 1
        %s310 = smul.addr %s309, 8
        %s311 = smul.addr %s310, 8
        %s312 = scalar_lea.vmem %s0, %s311
      $region52: #{tpu_custom_call.1} parent=47 // pred_fallthru
        _
      // Predicated region
      $region53: #{tpu_custom_call.1} parent=47 // pred_check
        %p313 = pneg %p62
      $region54: #{tpu_custom_call.1} parent=47 // pred_check_branch
        %315 = sbr.rel (%p313) target = $region56
      $region55: #{tpu_custom_call.1} parent=47 // pred_region
        %p316 = scmp.lt.s32.totalorder %s16, 1
        %s317 = scalar_select %p316, %s16, 1
        %s318 = smul.addr %s317, 2
        %s319 = smul.addr %s318, 8
        %s320 = scalar_lea.vmem %s1, %s319
      $region56: #{tpu_custom_call.1} parent=47 // pred_fallthru
        _
    $region48: #{tpu_custom_call.1} parent=5 // pred_fallthru
      _
    %p321 = scmp.le.s32.totalorder 1, %s16
    %p322 = scmp.lt.s32.totalorder %s16, 3
    %p323 = pnand %p321, %p322
    %p324 = pneg %p323
    // Predicated region
    $region57: #{tpu_custom_call.1} parent=5 // pred_check
      _
    $region58: #{tpu_custom_call.1} parent=5 // pred_check_branch
      %326 = sbr.rel (%p323) target = $region60
    $region59: #{tpu_custom_call.1} parent=5 // pred_region
      %s327 = ssub.s32 %s16, 1
      %p328 = scmp.lt.s32.totalorder %s21, 1
      %s329 = scalar_select %p328, %s21, 1
      %s330 = smul.addr %s329, 8
      %s331 = smul.addr %s330, 8
      %s332 = scalar_lea.vmem %s0, %s331
      %p333 = pneg %p42
      %p334 = pneg %p39
      %p335 = scmp.lt.s32.totalorder %s21, 1
      %s336 = scalar_select %p335, %s21, 1
      %s337 = smul.addr %s336, 2
      %s338 = smul.addr %s337, 8
      %s339 = scalar_lea.vmem %s1, %s338
      %p340 = pneg %p68
      %p341 = pneg %p65
      %p342 = pneg %p89
      %p343 = pneg %p86
      %p344 = pneg %p110
      %p345 = pneg %p107
      %p346 = pneg %p131
      %p347 = pneg %p128
      %p348 = pneg %p152
      %p349 = pneg %p149
      %p350 = pneg %p173
      %p351 = pneg %p170
      %p352 = pneg %p194
      %p353 = pneg %p191
      %p354 = pneg %p215
      %p355 = pneg %p212
      %p356 = pneg %p236
      %p357 = pneg %p233
      %p358 = pneg %p262
      %p359 = pneg %p259
      %p360 = scmp.lt.s32.totalorder %s21, 1
      %s361 = scalar_select %p360, %s21, 1
      %s362 = smul.addr %s361, 8
      %s363 = smul.addr %s362, 8
      %s364 = scalar_lea.vmem %s10, %s363
      %p365 = scmp.lt.s32.totalorder %s21, 1
      %s366 = scalar_select %p365, %s21, 1
      %s367 = smul.addr %s366, 8
      %s368 = smul.addr %s367, 8
      %s369 = scalar_lea.vmem %s0, %s368
      %p370 = scmp.lt.s32.totalorder %s21, 1
      %s371 = scalar_select %p370, %s21, 1
      %s372 = smul.addr %s371, 2
      %s373 = smul.addr %s372, 8
      %s374 = scalar_lea.vmem %s1, %s373
      %p375 = scmp.lt.s32.totalorder %s21, 1
      %s376 = scalar_select %p375, %s21, 1
      %s377 = smul.addr %s376, 8
      %s378 = smul.addr %s377, 8
      %s379 = scalar_lea.vmem %s10, %s378
      %v380 = vld [vmem:[%s369] sm:$0xff]
      %v381 = vld [vmem:[%s369 + $0x8] sm:$0xff]
      %v382 = vld [vmem:[%s369 + $0x10] sm:$0xff]
      %v383 = vld [vmem:[%s369 + $0x18] sm:$0xff]
      %v384 = vld [vmem:[%s369 + $0x20] sm:$0xff]
      %v385 = vld [vmem:[%s369 + $0x28] sm:$0xff]
      %v386 = vld [vmem:[%s369 + $0x30] sm:$0xff]
      %v387 = vld [vmem:[%s369 + $0x38] sm:$0xff]
      %v388 = vld [vmem:[%s2] sm:$0xff]
      %v389 = vld [vmem:[%s2 + $0x8] sm:$0xff]
      %v390 = vld [vmem:[%s2 + $0x10] sm:$0xff]
      %v391 = vld [vmem:[%s2 + $0x18] sm:$0xff]
      %vm392 = vcmask 261120
      %v394 = vsel %vm392, %v380, 0
      %v397 = vsel %vm392, %v381, 0
      %v400 = vsel %vm392, %v382, 0
      %v403 = vsel %vm392, %v383, 0
      %v406 = vsel %vm392, %v384, 0
      %v409 = vsel %vm392, %v385, 0
      %v412 = vsel %vm392, %v386, 0
      %v415 = vsel %vm392, %v387, 0
      %417 = vmatprep.subr.mxu0 0.0
      %418 = vmatpush1.msra.mxu0 %v388
      %419 = vmatprep.subr.mxu0 0.0
      %420 = vmatpush1.msra.mxu0 %v389
      %421 = vmatprep.subr.mxu0 0.0
      %422 = vmatpush1.msra.mxu0 %v390
      %423 = vmatprep.subr.mxu0 0.0
      %424 = vmatpush1.msra.mxu0 %v391
      %425 = vmatprep.subr.mxu0 0.0
      %426 = vmatpush1.msra.mxu0 0.0
      %427 = vmatprep.subr.mxu0 0.0
      %428 = vmatpush1.msra.mxu0 0.0
      %429 = vmatprep.subr.mxu0 0.0
      %430 = vmatpush1.msra.mxu0 0.0
      %431 = vmatprep.subr.mxu0 0.0
      %432 = vmatpush1.msra.mxu0 0.0
      %433 = vmatprep.subr.mxu0 0.0
      %434 = vmatpush1.msra.mxu0 0.0
      %435 = vmatprep.subr.mxu0 0.0
      %436 = vmatpush1.msra.mxu0 0.0
      %437 = vmatprep.subr.mxu0 0.0
      %438 = vmatpush1.msra.mxu0 0.0
      %439 = vmatprep.subr.mxu0 0.0
      %440 = vmatpush1.msra.mxu0 0.0
      %441 = vmatprep.subr.mxu0 0.0
      %442 = vmatpush1.msra.mxu0 0.0
      %443 = vmatprep.subr.mxu0 0.0
      %444 = vmatpush1.msra.mxu0 0.0
      %445 = vmatprep.subr.mxu0 0.0
      %446 = vmatpush1.msra.mxu0 0.0
      %447 = vmatprep.subr.mxu0 0.0
      %448 = vmatpush1.msra.mxu0 0.0
      %449 = vmatprep.subr.mxu0 0.0
      %450 = vmatpush1.msra.mxu0 0.0
      %451 = vmatprep.subr.mxu0 0.0
      %452 = vmatpush1.msra.mxu0 0.0
      %453 = vmatprep.subr.mxu0 0.0
      %454 = vmatpush1.msra.mxu0 0.0
      %455 = vmatprep.subr.mxu0 0.0
      %456 = vmatpush1.msra.mxu0 0.0
      %457 = vmatprep.subr.mxu0 0.0
      %458 = vmatpush1.msra.mxu0 0.0
      %459 = vmatprep.subr.mxu0 0.0
      %460 = vmatpush1.msra.mxu0 0.0
      %461 = vmatprep.subr.mxu0 0.0
      %462 = vmatpush1.msra.mxu0 0.0
      %463 = vmatprep.subr.mxu0 0.0
      %464 = vmatpush1.msra.mxu0 0.0
      %465 = vmatprep.subr.mxu0 0.0
      %466 = vmatpush1.msra.mxu0 0.0
      %467 = vmatprep.subr.mxu0 0.0
      %468 = vmatpush1.msra.mxu0 0.0
      %469 = vmatprep.subr.mxu0 0.0
      %470 = vmatpush1.msra.mxu0 0.0
      %471 = vmatprep.subr.mxu0 0.0
      %472 = vmatpush1.msra.mxu0 0.0
      %473 = vmatprep.subr.mxu0 0.0
      %474 = vmatpush1.msra.mxu0 0.0
      %475 = vmatprep.subr.mxu0 0.0
      %476 = vmatpush1.msra.mxu0 0.0
      %477 = vmatprep.subr.mxu0 0.0
      %478 = vmatpush1.msra.mxu0 0.0
      %479 = vmatprep.subr.mxu0 0.0
      %480 = vmatpush1.msra.mxu0 0.0
      %481 = vmatprep.mubr.f32.mxu0 0.0
      %482 = vmatmul.mubr.f32.gmra.mrb[0].mxu0 %v394
      %v483 = vpop.f32.mrb[0].mxu0
      %v484 = vadd.f32 0.0, %v483
      %v485 = vpop.f32.mrb[0].mxu0
      %486 = vmatprep.mubr.f32.mxu0 0.0
      %487 = vmatmul.mubr.f32.gmra.mrb[0].mxu0 %v397
      %v488 = vpop.f32.mrb[0].mxu0
      %v489 = vadd.f32 0.0, %v488
      %v490 = vpop.f32.mrb[0].mxu0
      %491 = vmatprep.mubr.f32.mxu0 0.0
      %492 = vmatmul.mubr.f32.gmra.mrb[0].mxu0 %v400
      %v493 = vpop.f32.mrb[0].mxu0
      %v494 = vadd.f32 0.0, %v493
      %v495 = vpop.f32.mrb[0].mxu0
      %496 = vmatprep.mubr.f32.mxu0 0.0
      %497 = vmatmul.mubr.f32.gmra.mrb[0].mxu0 %v403
      %v498 = vpop.f32.mrb[0].mxu0
      %v499 = vadd.f32 0.0, %v498
      %v500 = vpop.f32.mrb[0].mxu0
      %501 = vmatprep.mubr.f32.mxu0 0.0
      %502 = vmatmul.mubr.f32.gmra.mrb[0].mxu0 %v406
      %v503 = vpop.f32.mrb[0].mxu0
      %v504 = vadd.f32 0.0, %v503
      %v505 = vpop.f32.mrb[0].mxu0
      %506 = vmatprep.mubr.f32.mxu0 0.0
      %507 = vmatmul.mubr.f32.gmra.mrb[0].mxu0 %v409
      %v508 = vpop.f32.mrb[0].mxu0
      %v509 = vadd.f32 0.0, %v508
      %v510 = vpop.f32.mrb[0].mxu0
      %511 = vmatprep.mubr.f32.mxu0 0.0
      %512 = vmatmul.mubr.f32.gmra.mrb[0].mxu0 %v412
      %v513 = vpop.f32.mrb[0].mxu0
      %v514 = vadd.f32 0.0, %v513
      %v515 = vpop.f32.mrb[0].mxu0
      %516 = vmatprep.mubr.f32.mxu0 0.0
      %517 = vmatmul.mubr.f32.gmra.mrb[0].mxu0 %v415
      %v518 = vpop.f32.mrb[0].mxu0
      %v519 = vadd.f32 0.0, %v518
      %v520 = vpop.f32.mrb[0].mxu0
      %521 = vdwg.mxu0
      %v522 = vld [vmem:[%s374] sm:$0xff]
      %v523 = vld [vmem:[%s374 + $0x8] sm:$0xff]
      %v524 = vld [vmem:[%s3] sm:$0xff]
      %v525 = vld [vmem:[%s3 + $0x8] sm:$0xff]
      %v526 = vld [vmem:[%s3 + $0x10] sm:$0xff]
      %v527 = vld [vmem:[%s3 + $0x18] sm:$0xff]
      %v528 = vld [vmem:[%s3 + $0x20] sm:$0xff]
      %v529 = vld [vmem:[%s3 + $0x28] sm:$0xff]
      %v530 = vld [vmem:[%s3 + $0x30] sm:$0xff]
      %v531 = vld [vmem:[%s3 + $0x38] sm:$0xff]
      %v532 = vld [vmem:[%s3 + $0x40] sm:$0xff]
      %v533 = vld [vmem:[%s3 + $0x48] sm:$0xff]
      %v534 = vld [vmem:[%s3 + $0x50] sm:$0xff]
      %v535 = vld [vmem:[%s3 + $0x58] sm:$0xff]
      %v536 = vld [vmem:[%s3 + $0x60] sm:$0xff]
      %v537 = vld [vmem:[%s3 + $0x68] sm:$0xff]
      %v538 = vld [vmem:[%s3 + $0x70] sm:$0xff]
      %v539 = vld [vmem:[%s3 + $0x78] sm:$0xff]
      %v540 = vld [vmem:[%s3 + $0x80] sm:$0xff]
      %v541 = vld [vmem:[%s3 + $0x88] sm:$0xff]
      %v542 = vld [vmem:[%s3 + $0x90] sm:$0xff]
      %v543 = vld [vmem:[%s3 + $0x98] sm:$0xff]
      %v544 = vld [vmem:[%s3 + $0xa0] sm:$0xff]
      %v545 = vld [vmem:[%s3 + $0xa8] sm:$0xff]
      %v546 = vld [vmem:[%s3 + $0xb0] sm:$0xff]
      %v547 = vld [vmem:[%s3 + $0xb8] sm:$0xff]
      %v548 = vld [vmem:[%s3 + $0xc0] sm:$0xff]
      %v549 = vld [vmem:[%s3 + $0xc8] sm:$0xff]
      %v550 = vld [vmem:[%s3 + $0xd0] sm:$0xff]
      %v551 = vld [vmem:[%s3 + $0xd8] sm:$0xff]
      %v552 = vld [vmem:[%s3 + $0xe0] sm:$0xff]
      %v553 = vld [vmem:[%s3 + $0xe8] sm:$0xff]
      %v554 = vld [vmem:[%s3 + $0xf0] sm:$0xff]
      %v555 = vld [vmem:[%s3 + $0xf8] sm:$0xff]
      %v556 = vld [vmem:[%s4] sm:$0x1]
      %v558 = vlaneseq
      %v559 = vshrl.u32 %v558, 7
      %v560 = vsub.s32 0, %v559
      %v561 = vrot.slane %v556, %v560
      %563 = vmatprep.subr.mxu0 0.0
      %564 = vmatpush1.msra.mxu0 %v524
      %565 = vmatprep.subr.mxu0 0.0
      %566 = vmatpush1.msra.mxu0 %v525
      %567 = vmatprep.subr.mxu0 0.0
      %568 = vmatpush1.msra.mxu0 %v526
      %569 = vmatprep.subr.mxu0 0.0
      %570 = vmatpush1.msra.mxu0 %v527
      %571 = vmatprep.subr.mxu0 0.0
      %572 = vmatpush1.msra.mxu0 %v528
      %573 = vmatprep.subr.mxu0 0.0
      %574 = vmatpush1.msra.mxu0 %v529
      %575 = vmatprep.subr.mxu0 0.0
      %576 = vmatpush1.msra.mxu0 %v530
      %577 = vmatprep.subr.mxu0 0.0
      %578 = vmatpush1.msra.mxu0 %v531
      %579 = vmatprep.subr.mxu0 0.0
      %580 = vmatpush1.msra.mxu0 %v532
      %581 = vmatprep.subr.mxu0 0.0
      %582 = vmatpush1.msra.mxu0 %v533
      %583 = vmatprep.subr.mxu0 0.0
      %584 = vmatpush1.msra.mxu0 %v534
      %585 = vmatprep.subr.mxu0 0.0
      %586 = vmatpush1.msra.mxu0 %v535
      %587 = vmatprep.subr.mxu0 0.0
      %588 = vmatpush1.msra.mxu0 %v536
      %589 = vmatprep.subr.mxu0 0.0
      %590 = vmatpush1.msra.mxu0 %v537
      %591 = vmatprep.subr.mxu0 0.0
      %592 = vmatpush1.msra.mxu0 %v538
      %593 = vmatprep.subr.mxu0 0.0
      %594 = vmatpush1.msra.mxu0 %v539
      %595 = vmatprep.subr.mxu0 0.0
      %596 = vmatpush1.msra.mxu0 %v540
      %597 = vmatprep.subr.mxu0 0.0
      %598 = vmatpush1.msra.mxu0 %v541
      %599 = vmatprep.subr.mxu0 0.0
      %600 = vmatpush1.msra.mxu0 %v542
      %601 = vmatprep.subr.mxu0 0.0
      %602 = vmatpush1.msra.mxu0 %v543
      %603 = vmatprep.subr.mxu0 0.0
      %604 = vmatpush1.msra.mxu0 %v544
      %605 = vmatprep.subr.mxu0 0.0
      %606 = vmatpush1.msra.mxu0 %v545
      %607 = vmatprep.subr.mxu0 0.0
      %608 = vmatpush1.msra.mxu0 %v546
      %609 = vmatprep.subr.mxu0 0.0
      %610 = vmatpush1.msra.mxu0 %v547
      %611 = vmatprep.subr.mxu0 0.0
      %612 = vmatpush1.msra.mxu0 %v548
      %613 = vmatprep.subr.mxu0 0.0
      %614 = vmatpush1.msra.mxu0 %v549
      %615 = vmatprep.subr.mxu0 0.0
      %616 = vmatpush1.msra.mxu0 %v550
      %617 = vmatprep.subr.mxu0 0.0
      %618 = vmatpush1.msra.mxu0 %v551
      %619 = vmatprep.subr.mxu0 0.0
      %620 = vmatpush1.msra.mxu0 %v552
      %621 = vmatprep.subr.mxu0 0.0
      %622 = vmatpush1.msra.mxu0 %v553
      %623 = vmatprep.subr.mxu0 0.0
      %624 = vmatpush1.msra.mxu0 %v554
      %625 = vmatprep.subr.mxu0 0.0
      %626 = vmatpush1.msra.mxu0 %v555
      %627 = vmatprep.mubr.f32.mxu0 %v523
      %628 = vmatmul.mubr.f32.gmra.mrb[0].mxu0 %v522
      %v629 = vpop.f32.mrb[0].mxu0
      %v630 = vadd.f32 %v561, %v629
      %v631 = vpop.f32.mrb[0].mxu0
      %632 = vdwg.mxu0
      %v633 = vsel %vm392, %v630, 0.0
      %634 = vadd.xlane.f32.xlu0 %v633
      %v635 = vpop.xlane.xlu0 %634
      %v636 = vrcp.pop 32.0
      %v637 = vmul.f32 %v635, %v636
      %v638 = vsub.f32 %v630, %v637
      %v639 = vmul.f32 %v638, %v638
      %v640 = vsel %vm392, %v639, 0.0
      %641 = vadd.xlane.f32.xlu0 %v640
      %v642 = vpop.xlane.xlu0 %641
      %v643 = vmul.f32 %v642, %v636
      %v644 = vadd.f32 %v643, 1e-05
      %v645 = vrsqrt.pop %v644
      %v646 = vmul.f32 %v638, %v645
      %v647 = vld [vmem:[%s5] sm:$0x1]
      %v649 = vlaneseq
      %v650 = vshrl.u32 %v649, 7
      %v651 = vsub.s32 0, %v650
      %v652 = vrot.slane %v647, %v651
      %v654 = vmul.f32 %v646, %v652
      %v655 = vld [vmem:[%s6] sm:$0x1]
      %v657 = vlaneseq
      %v658 = vshrl.u32 %v657, 7
      %v659 = vsub.s32 0, %v658
      %v660 = vrot.slane %v655, %v659
      %v662 = vadd.f32 %v654, %v660
      %v663 = vld [vmem:[%s7] sm:$0xff]
      %v664 = vld [vmem:[%s7 + $0x8] sm:$0xff]
      %v665 = vld [vmem:[%s7 + $0x10] sm:$0xff]
      %v666 = vld [vmem:[%s7 + $0x18] sm:$0xff]
      %v668 = vsel %vm392, %v662, 0
      %670 = vmatprep.subr.mxu0 0.0
      %671 = vmatpush1.msra.mxu0 %v663
      %672 = vmatprep.subr.mxu0 0.0
      %673 = vmatpush1.msra.mxu0 %v664
      %674 = vmatprep.subr.mxu0 0.0
      %675 = vmatpush1.msra.mxu0 %v665
      %676 = vmatprep.subr.mxu0 0.0
      %677 = vmatpush1.msra.mxu0 %v666
      %678 = vmatprep.subr.mxu0 0.0
      %679 = vmatpush1.msra.mxu0 0.0
      %680 = vmatprep.subr.mxu0 0.0
      %681 = vmatpush1.msra.mxu0 0.0
      %682 = vmatprep.subr.mxu0 0.0
      %683 = vmatpush1.msra.mxu0 0.0
      %684 = vmatprep.subr.mxu0 0.0
      %685 = vmatpush1.msra.mxu0 0.0
      %686 = vmatprep.subr.mxu0 0.0
      %687 = vmatpush1.msra.mxu0 0.0
      %688 = vmatprep.subr.mxu0 0.0
      %689 = vmatpush1.msra.mxu0 0.0
      %690 = vmatprep.subr.mxu0 0.0
      %691 = vmatpush1.msra.mxu0 0.0
      %692 = vmatprep.subr.mxu0 0.0
      %693 = vmatpush1.msra.mxu0 0.0
      %694 = vmatprep.subr.mxu0 0.0
      %695 = vmatpush1.msra.mxu0 0.0
      %696 = vmatprep.subr.mxu0 0.0
      %697 = vmatpush1.msra.mxu0 0.0
      %698 = vmatprep.subr.mxu0 0.0
      %699 = vmatpush1.msra.mxu0 0.0
      %700 = vmatprep.subr.mxu0 0.0
      %701 = vmatpush1.msra.mxu0 0.0
      %702 = vmatprep.subr.mxu0 0.0
      %703 = vmatpush1.msra.mxu0 0.0
      %704 = vmatprep.subr.mxu0 0.0
      %705 = vmatpush1.msra.mxu0 0.0
      %706 = vmatprep.subr.mxu0 0.0
      %707 = vmatpush1.msra.mxu0 0.0
      %708 = vmatprep.subr.mxu0 0.0
      %709 = vmatpush1.msra.mxu0 0.0
      %710 = vmatprep.subr.mxu0 0.0
      %711 = vmatpush1.msra.mxu0 0.0
      %712 = vmatprep.subr.mxu0 0.0
      %713 = vmatpush1.msra.mxu0 0.0
      %714 = vmatprep.subr.mxu0 0.0
      %715 = vmatpush1.msra.mxu0 0.0
      %716 = vmatprep.subr.mxu0 0.0
      %717 = vmatpush1.msra.mxu0 0.0
      %718 = vmatprep.subr.mxu0 0.0
      %719 = vmatpush1.msra.mxu0 0.0
      %720 = vmatprep.subr.mxu0 0.0
      %721 = vmatpush1.msra.mxu0 0.0
      %722 = vmatprep.subr.mxu0 0.0
      %723 = vmatpush1.msra.mxu0 0.0
      %724 = vmatprep.subr.mxu0 0.0
      %725 = vmatpush1.msra.mxu0 0.0
      %726 = vmatprep.subr.mxu0 0.0
      %727 = vmatpush1.msra.mxu0 0.0
      %728 = vmatprep.subr.mxu0 0.0
      %729 = vmatpush1.msra.mxu0 0.0
      %730 = vmatprep.subr.mxu0 0.0
      %731 = vmatpush1.msra.mxu0 0.0
      %732 = vmatprep.subr.mxu0 0.0
      %733 = vmatpush1.msra.mxu0 0.0
      %734 = vmatprep.mubr.f32.mxu0 0.0
      %735 = vmatmul.mubr.f32.gmra.mrb[0].mxu0 %v668
      %v736 = vpop.f32.mrb[0].mxu0
      %v737 = vadd.f32 0.0, %v736
      %v738 = vpop.f32.mrb[0].mxu0
      %739 = vdwg.mxu0
      %v740 = vld [vmem:[%s8] sm:$0xff]
      %v741 = vld [vmem:[%s8 + $0x8] sm:$0xff]
      %v742 = vld [vmem:[%s8 + $0x10] sm:$0xff]
      %v743 = vld [vmem:[%s8 + $0x18] sm:$0xff]
      %vm744 = vcmask 64512
      %v746 = vsel %vm744, %v484, 0
      %v749 = vsel %vm744, %v489, 0
      %v752 = vsel %vm744, %v494, 0
      %v755 = vsel %vm744, %v499, 0
      %v758 = vsel %vm744, %v504, 0
      %v761 = vsel %vm744, %v509, 0
      %v764 = vsel %vm744, %v514, 0
      %v767 = vsel %vm744, %v519, 0
      %v770 = vsel %vm744, %v737, 0
      %772 = vmatprep.subr.mxu0 0.0
      %773 = vmatpush1.xpose.msra.mxu0 %v770
      %774 = vmatprep.subr.mxu0 0.0
      %775 = vmatpush1.xpose.msra.mxu0 0.0
      %776 = vmatprep.subr.mxu0 0.0
      %777 = vmatpush1.xpose.msra.mxu0 0.0
      %778 = vmatprep.subr.mxu0 0.0
      %779 = vmatpush1.xpose.msra.mxu0 0.0
      %780 = vmatprep.subr.mxu0 0.0
      %781 = vmatpush1.xpose.msra.mxu0 0.0
      %782 = vmatprep.subr.mxu0 0.0
      %783 = vmatpush1.xpose.msra.mxu0 0.0
      %784 = vmatprep.subr.mxu0 0.0
      %785 = vmatpush1.xpose.msra.mxu0 0.0
      %786 = vmatprep.subr.mxu0 0.0
      %787 = vmatpush1.xpose.msra.mxu0 0.0
      %788 = vmatprep.subr.mxu0 0.0
      %789 = vmatpush1.xpose.msra.mxu0 0.0
      %790 = vmatprep.subr.mxu0 0.0
      %791 = vmatpush1.xpose.msra.mxu0 0.0
      %792 = vmatprep.subr.mxu0 0.0
      %793 = vmatpush1.xpose.msra.mxu0 0.0
      %794 = vmatprep.subr.mxu0 0.0
      %795 = vmatpush1.xpose.msra.mxu0 0.0
      %796 = vmatprep.subr.mxu0 0.0
      %797 = vmatpush1.xpose.msra.mxu0 0.0
      %798 = vmatprep.subr.mxu0 0.0
      %799 = vmatpush1.xpose.msra.mxu0 0.0
      %800 = vmatprep.subr.mxu0 0.0
      %801 = vmatpush1.xpose.msra.mxu0 0.0
      %802 = vmatprep.subr.mxu0 0.0
      %803 = vmatpush1.xpose.msra.mxu0 0.0
      %804 = vmatprep.subr.mxu0 0.0
      %805 = vmatpush1.xpose.msra.mxu0 0.0
      %806 = vmatprep.subr.mxu0 0.0
      %807 = vmatpush1.xpose.msra.mxu0 0.0
      %808 = vmatprep.subr.mxu0 0.0
      %809 = vmatpush1.xpose.msra.mxu0 0.0
      %810 = vmatprep.subr.mxu0 0.0
      %811 = vmatpush1.xpose.msra.mxu0 0.0
      %812 = vmatprep.subr.mxu0 0.0
      %813 = vmatpush1.xpose.msra.mxu0 0.0
      %814 = vmatprep.subr.mxu0 0.0
      %815 = vmatpush1.xpose.msra.mxu0 0.0
      %816 = vmatprep.subr.mxu0 0.0
      %817 = vmatpush1.xpose.msra.mxu0 0.0
      %818 = vmatprep.subr.mxu0 0.0
      %819 = vmatpush1.xpose.msra.mxu0 0.0
      %820 = vmatprep.subr.mxu0 0.0
      %821 = vmatpush1.xpose.msra.mxu0 0.0
      %822 = vmatprep.subr.mxu0 0.0
      %823 = vmatpush1.xpose.msra.mxu0 0.0
      %824 = vmatprep.subr.mxu0 0.0
      %825 = vmatpush1.xpose.msra.mxu0 0.0
      %826 = vmatprep.subr.mxu0 0.0
      %827 = vmatpush1.xpose.msra.mxu0 0.0
      %828 = vmatprep.subr.mxu0 0.0
      %829 = vmatpush1.xpose.msra.mxu0 0.0
      %830 = vmatprep.subr.mxu0 0.0
      %831 = vmatpush1.xpose.msra.mxu0 0.0
      %832 = vmatprep.subr.mxu0 0.0
      %833 = vmatpush1.xpose.msra.mxu0 0.0
      %834 = vmatprep.subr.mxu0 0.0
      %835 = vmatpush1.xpose.msra.mxu0 0.0
      %836 = vmatprep.mubr.f32.mxu0 0.0
      %837 = vmatmul.mubr.f32.gmra.mrb[0].mxu0 %v746
      %v838 = vpop.f32.mrb[0].mxu0
      %v839 = vadd.f32 0.0, %v838
      %v840 = vpop.f32.mrb[0].mxu0
      %841 = vmatprep.mubr.f32.mxu0 0.0
      %842 = vmatmul.mubr.f32.gmra.mrb[0].mxu0 %v749
      %v843 = vpop.f32.mrb[0].mxu0
      %v844 = vadd.f32 0.0, %v843
      %v845 = vpop.f32.mrb[0].mxu0
      %846 = vmatprep.mubr.f32.mxu0 0.0
      %847 = vmatmul.mubr.f32.gmra.mrb[0].mxu0 %v752
      %v848 = vpop.f32.mrb[0].mxu0
      %v849 = vadd.f32 0.0, %v848
      %v850 = vpop.f32.mrb[0].mxu0
      %851 = vmatprep.mubr.f32.mxu0 0.0
      %852 = vmatmul.mubr.f32.gmra.mrb[0].mxu0 %v755
      %v853 = vpop.f32.mrb[0].mxu0
      %v854 = vadd.f32 0.0, %v853
      %v855 = vpop.f32.mrb[0].mxu0
      %856 = vmatprep.mubr.f32.mxu0 0.0
      %857 = vmatmul.mubr.f32.gmra.mrb[0].mxu0 %v758
      %v858 = vpop.f32.mrb[0].mxu0
      %v859 = vadd.f32 0.0, %v858
      %v860 = vpop.f32.mrb[0].mxu0
      %861 = vmatprep.mubr.f32.mxu0 0.0
      %862 = vmatmul.mubr.f32.gmra.mrb[0].mxu0 %v761
      %v863 = vpop.f32.mrb[0].mxu0
      %v864 = vadd.f32 0.0, %v863
      %v865 = vpop.f32.mrb[0].mxu0
      %866 = vmatprep.mubr.f32.mxu0 0.0
      %867 = vmatmul.mubr.f32.gmra.mrb[0].mxu0 %v764
      %v868 = vpop.f32.mrb[0].mxu0
      %v869 = vadd.f32 0.0, %v868
      %v870 = vpop.f32.mrb[0].mxu0
      %871 = vmatprep.mubr.f32.mxu0 0.0
      %872 = vmatmul.mubr.f32.gmra.mrb[0].mxu0 %v767
      %v873 = vpop.f32.mrb[0].mxu0
      %v874 = vadd.f32 0.0, %v873
      %v875 = vpop.f32.mrb[0].mxu0
      %876 = vdwg.mxu0
      %v877 = vmul.f32 %v839, 0.5
      %v878 = vmul.f32 %v844, 0.5
      %v879 = vmul.f32 %v849, 0.5
      %v880 = vmul.f32 %v854, 0.5
      %v881 = vmul.f32 %v859, 0.5
      %v882 = vmul.f32 %v864, 0.5
      %v883 = vmul.f32 %v869, 0.5
      %v884 = vmul.f32 %v874, 0.5
      %v885 = vsel %vm744, %v877, -inf
      %886 = vmax.xlane.f32.xlu0 %v885
      %v887 = vpop.xlane.xlu0 %886
      %v888 = vsel %vm744, %v878, -inf
      %889 = vmax.xlane.f32.xlu0 %v888
      %v890 = vpop.xlane.xlu0 %889
      %v891 = vsel %vm744, %v879, -inf
      %892 = vmax.xlane.f32.xlu0 %v891
      %v893 = vpop.xlane.xlu0 %892
      %v894 = vsel %vm744, %v880, -inf
      %895 = vmax.xlane.f32.xlu0 %v894
      %v896 = vpop.xlane.xlu0 %895
      %v897 = vsel %vm744, %v881, -inf
      %898 = vmax.xlane.f32.xlu0 %v897
      %v899 = vpop.xlane.xlu0 %898
      %v900 = vsel %vm744, %v882, -inf
      %901 = vmax.xlane.f32.xlu0 %v900
      %v902 = vpop.xlane.xlu0 %901
      %v903 = vsel %vm744, %v883, -inf
      %904 = vmax.xlane.f32.xlu0 %v903
      %v905 = vpop.xlane.xlu0 %904
      %v906 = vsel %vm744, %v884, -inf
      %907 = vmax.xlane.f32.xlu0 %v906
      %v908 = vpop.xlane.xlu0 %907
      %v909 = vsub.f32 %v877, %v887
      %v910 = vsub.f32 %v878, %v890
      %v911 = vsub.f32 %v879, %v893
      %v912 = vsub.f32 %v880, %v896
      %v913 = vsub.f32 %v881, %v899
      %v914 = vsub.f32 %v882, %v902
      %v915 = vsub.f32 %v883, %v905
      %v916 = vsub.f32 %v884, %v908
      %v917 = vmul.f32 %v909, 1.442695
      %v918 = vpow.pop %v917
      %v919 = vmul.f32 %v910, 1.442695
      %v920 = vpow.pop %v919
      %v921 = vmul.f32 %v911, 1.442695
      %v922 = vpow.pop %v921
      %v923 = vmul.f32 %v912, 1.442695
      %v924 = vpow.pop %v923
      %v925 = vmul.f32 %v913, 1.442695
      %v926 = vpow.pop %v925
      %v927 = vmul.f32 %v914, 1.442695
      %v928 = vpow.pop %v927
      %v929 = vmul.f32 %v915, 1.442695
      %v930 = vpow.pop %v929
      %v931 = vmul.f32 %v916, 1.442695
      %v932 = vpow.pop %v931
      %v933 = vsel %vm744, %v918, 0.0
      %934 = vadd.xlane.f32.xlu0 %v933
      %v935 = vpop.xlane.xlu0 %934
      %v936 = vsel %vm744, %v920, 0.0
      %937 = vadd.xlane.f32.xlu0 %v936
      %v938 = vpop.xlane.xlu0 %937
      %v939 = vsel %vm744, %v922, 0.0
      %940 = vadd.xlane.f32.xlu0 %v939
      %v941 = vpop.xlane.xlu0 %940
      %v942 = vsel %vm744, %v924, 0.0
      %943 = vadd.xlane.f32.xlu0 %v942
      %v944 = vpop.xlane.xlu0 %943
      %v945 = vsel %vm744, %v926, 0.0
      %946 = vadd.xlane.f32.xlu0 %v945
      %v947 = vpop.xlane.xlu0 %946
      %v948 = vsel %vm744, %v928, 0.0
      %949 = vadd.xlane.f32.xlu0 %v948
      %v950 = vpop.xlane.xlu0 %949
      %v951 = vsel %vm744, %v930, 0.0
      %952 = vadd.xlane.f32.xlu0 %v951
      %v953 = vpop.xlane.xlu0 %952
      %v954 = vsel %vm744, %v932, 0.0
      %955 = vadd.xlane.f32.xlu0 %v954
      %v956 = vpop.xlane.xlu0 %955
      %v957 = vrcp.pop %v935
      %v958 = vrcp.pop %v938
      %v959 = vrcp.pop %v941
      %v960 = vrcp.pop %v944
      %v961 = vrcp.pop %v947
      %v962 = vrcp.pop %v950
      %v963 = vrcp.pop %v953
      %v964 = vrcp.pop %v956
      %v965 = vmul.f32 %v918, %v957
      %v966 = vmul.f32 %v920, %v958
      %v967 = vmul.f32 %v922, %v959
      %v968 = vmul.f32 %v924, %v960
      %v969 = vmul.f32 %v926, %v961
      %v970 = vmul.f32 %v928, %v962
      %v971 = vmul.f32 %v930, %v963
      %v972 = vmul.f32 %v932, %v964
      %973 = vrot.lane.b32.xlu0 %v737, 96
      %v974 = vpop.permute.xlu0 %973
      %v977 = vsel %vm744, %v965, 0
      %v980 = vsel %vm744, %v966, 0
      %v983 = vsel %vm744, %v967, 0
      %v986 = vsel %vm744, %v968, 0
      %v989 = vsel %vm744, %v969, 0
      %v992 = vsel %vm744, %v970, 0
      %v995 = vsel %vm744, %v971, 0
      %v998 = vsel %vm744, %v972, 0
      %1000 = vmatprep.subr.mxu0 0.0
      %1001 = vmatpush1.msra.mxu0 %v974
      %1002 = vmatprep.subr.mxu0 0.0
      %1003 = vmatpush1.msra.mxu0 0.0
      %1004 = vmatprep.subr.mxu0 0.0
      %1005 = vmatpush1.msra.mxu0 0.0
      %1006 = vmatprep.subr.mxu0 0.0
      %1007 = vmatpush1.msra.mxu0 0.0
      %1008 = vmatprep.subr.mxu0 0.0
      %1009 = vmatpush1.msra.mxu0 0.0
      %1010 = vmatprep.subr.mxu0 0.0
      %1011 = vmatpush1.msra.mxu0 0.0
      %1012 = vmatprep.subr.mxu0 0.0
      %1013 = vmatpush1.msra.mxu0 0.0
      %1014 = vmatprep.subr.mxu0 0.0
      %1015 = vmatpush1.msra.mxu0 0.0
      %1016 = vmatprep.subr.mxu0 0.0
      %1017 = vmatpush1.msra.mxu0 0.0
      %1018 = vmatprep.subr.mxu0 0.0
      %1019 = vmatpush1.msra.mxu0 0.0
      %1020 = vmatprep.subr.mxu0 0.0
      %1021 = vmatpush1.msra.mxu0 0.0
      %1022 = vmatprep.subr.mxu0 0.0
      %1023 = vmatpush1.msra.mxu0 0.0
      %1024 = vmatprep.subr.mxu0 0.0
      %1025 = vmatpush1.msra.mxu0 0.0
      %1026 = vmatprep.subr.mxu0 0.0
      %1027 = vmatpush1.msra.mxu0 0.0
      %1028 = vmatprep.subr.mxu0 0.0
      %1029 = vmatpush1.msra.mxu0 0.0
      %1030 = vmatprep.subr.mxu0 0.0
      %1031 = vmatpush1.msra.mxu0 0.0
      %1032 = vmatprep.subr.mxu0 0.0
      %1033 = vmatpush1.msra.mxu0 0.0
      %1034 = vmatprep.subr.mxu0 0.0
      %1035 = vmatpush1.msra.mxu0 0.0
      %1036 = vmatprep.subr.mxu0 0.0
      %1037 = vmatpush1.msra.mxu0 0.0
      %1038 = vmatprep.subr.mxu0 0.0
      %1039 = vmatpush1.msra.mxu0 0.0
      %1040 = vmatprep.subr.mxu0 0.0
      %1041 = vmatpush1.msra.mxu0 0.0
      %1042 = vmatprep.subr.mxu0 0.0
      %1043 = vmatpush1.msra.mxu0 0.0
      %1044 = vmatprep.subr.mxu0 0.0
      %1045 = vmatpush1.msra.mxu0 0.0
      %1046 = vmatprep.subr.mxu0 0.0
      %1047 = vmatpush1.msra.mxu0 0.0
      %1048 = vmatprep.subr.mxu0 0.0
      %1049 = vmatpush1.msra.mxu0 0.0
      %1050 = vmatprep.subr.mxu0 0.0
      %1051 = vmatpush1.msra.mxu0 0.0
      %1052 = vmatprep.subr.mxu0 0.0
      %1053 = vmatpush1.msra.mxu0 0.0
      %1054 = vmatprep.subr.mxu0 0.0
      %1055 = vmatpush1.msra.mxu0 0.0
      %1056 = vmatprep.subr.mxu0 0.0
      %1057 = vmatpush1.msra.mxu0 0.0
      %1058 = vmatprep.subr.mxu0 0.0
      %1059 = vmatpush1.msra.mxu0 0.0
      %1060 = vmatprep.subr.mxu0 0.0
      %1061 = vmatpush1.msra.mxu0 0.0
      %1062 = vmatprep.subr.mxu0 0.0
      %1063 = vmatpush1.msra.mxu0 0.0
      %1064 = vmatprep.mubr.f32.mxu0 0.0
      %1065 = vmatmul.mubr.f32.gmra.mrb[0].mxu0 %v977
      %v1066 = vpop.f32.mrb[0].mxu0
      %v1067 = vadd.f32 0.0, %v1066
      %v1068 = vpop.f32.mrb[0].mxu0
      %1069 = vmatprep.mubr.f32.mxu0 0.0
      %1070 = vmatmul.mubr.f32.gmra.mrb[0].mxu0 %v980
      %v1071 = vpop.f32.mrb[0].mxu0
      %v1072 = vadd.f32 0.0, %v1071
      %v1073 = vpop.f32.mrb[0].mxu0
      %1074 = vmatprep.mubr.f32.mxu0 0.0
      %1075 = vmatmul.mubr.f32.gmra.mrb[0].mxu0 %v983
      %v1076 = vpop.f32.mrb[0].mxu0
      %v1077 = vadd.f32 0.0, %v1076
      %v1078 = vpop.f32.mrb[0].mxu0
      %1079 = vmatprep.mubr.f32.mxu0 0.0
      %1080 = vmatmul.mubr.f32.gmra.mrb[0].mxu0 %v986
      %v1081 = vpop.f32.mrb[0].mxu0
      %v1082 = vadd.f32 0.0, %v1081
      %v1083 = vpop.f32.mrb[0].mxu0
      %1084 = vmatprep.mubr.f32.mxu0 0.0
      %1085 = vmatmul.mubr.f32.gmra.mrb[0].mxu0 %v989
      %v1086 = vpop.f32.mrb[0].mxu0
      %v1087 = vadd.f32 0.0, %v1086
      %v1088 = vpop.f32.mrb[0].mxu0
      %1089 = vmatprep.mubr.f32.mxu0 0.0
      %1090 = vmatmul.mubr.f32.gmra.mrb[0].mxu0 %v992
      %v1091 = vpop.f32.mrb[0].mxu0
      %v1092 = vadd.f32 0.0, %v1091
      %v1093 = vpop.f32.mrb[0].mxu0
      %1094 = vmatprep.mubr.f32.mxu0 0.0
      %1095 = vmatmul.mubr.f32.gmra.mrb[0].mxu0 %v995
      %v1096 = vpop.f32.mrb[0].mxu0
      %v1097 = vadd.f32 0.0, %v1096
      %v1098 = vpop.f32.mrb[0].mxu0
      %1099 = vmatprep.mubr.f32.mxu0 0.0
      %1100 = vmatmul.mubr.f32.gmra.mrb[0].mxu0 %v998
      %v1101 = vpop.f32.mrb[0].mxu0
      %v1102 = vadd.f32 0.0, %v1101
      %v1103 = vpop.f32.mrb[0].mxu0
      %1104 = vdwg.mxu0
      %1105 = vrot.lane.b32.xlu0 %v484, 120
      %v1106 = vpop.permute.xlu0 %1105
      %1107 = vrot.lane.b32.xlu0 %v489, 120
      %v1108 = vpop.permute.xlu0 %1107
      %1109 = vrot.lane.b32.xlu0 %v494, 120
      %v1110 = vpop.permute.xlu0 %1109
      %1111 = vrot.lane.b32.xlu0 %v499, 120
      %v1112 = vpop.permute.xlu0 %1111
      %1113 = vrot.lane.b32.xlu0 %v504, 120
      %v1114 = vpop.permute.xlu0 %1113
      %1115 = vrot.lane.b32.xlu0 %v509, 120
      %v1116 = vpop.permute.xlu0 %1115
      %1117 = vrot.lane.b32.xlu0 %v514, 120
      %v1118 = vpop.permute.xlu0 %1117
      %1119 = vrot.lane.b32.xlu0 %v519, 120
      %v1120 = vpop.permute.xlu0 %1119
      %1121 = vrot.lane.b32.xlu0 %v737, 120
      %v1122 = vpop.permute.xlu0 %1121
      %v1123 = vsel %vm744, %v1106, 0
      %v1125 = vsel %vm744, %v1108, 0
      %v1127 = vsel %vm744, %v1110, 0
      %v1129 = vsel %vm744, %v1112, 0
      %v1131 = vsel %vm744, %v1114, 0
      %v1133 = vsel %vm744, %v1116, 0
      %v1135 = vsel %vm744, %v1118, 0
      %v1137 = vsel %vm744, %v1120, 0
      %v1139 = vsel %vm744, %v1122, 0
      %1141 = vmatprep.subr.mxu0 0.0
      %1142 = vmatpush1.xpose.msra.mxu0 %v1139
      %1143 = vmatprep.subr.mxu0 0.0
      %1144 = vmatpush1.xpose.msra.mxu0 0.0
      %1145 = vmatprep.subr.mxu0 0.0
      %1146 = vmatpush1.xpose.msra.mxu0 0.0
      %1147 = vmatprep.subr.mxu0 0.0
      %1148 = vmatpush1.xpose.msra.mxu0 0.0
      %1149 = vmatprep.subr.mxu0 0.0
      %1150 = vmatpush1.xpose.msra.mxu0 0.0
      %1151 = vmatprep.subr.mxu0 0.0
      %1152 = vmatpush1.xpose.msra.mxu0 0.0
      %1153 = vmatprep.subr.mxu0 0.0
      %1154 = vmatpush1.xpose.msra.mxu0 0.0
      %1155 = vmatprep.subr.mxu0 0.0
      %1156 = vmatpush1.xpose.msra.mxu0 0.0
      %1157 = vmatprep.subr.mxu0 0.0
      %1158 = vmatpush1.xpose.msra.mxu0 0.0
      %1159 = vmatprep.subr.mxu0 0.0
      %1160 = vmatpush1.xpose.msra.mxu0 0.0
      %1161 = vmatprep.subr.mxu0 0.0
      %1162 = vmatpush1.xpose.msra.mxu0 0.0
      %1163 = vmatprep.subr.mxu0 0.0
      %1164 = vmatpush1.xpose.msra.mxu0 0.0
      %1165 = vmatprep.subr.mxu0 0.0
      %1166 = vmatpush1.xpose.msra.mxu0 0.0
      %1167 = vmatprep.subr.mxu0 0.0
      %1168 = vmatpush1.xpose.msra.mxu0 0.0
      %1169 = vmatprep.subr.mxu0 0.0
      %1170 = vmatpush1.xpose.msra.mxu0 0.0
      %1171 = vmatprep.subr.mxu0 0.0
      %1172 = vmatpush1.xpose.msra.mxu0 0.0
      %1173 = vmatprep.subr.mxu0 0.0
      %1174 = vmatpush1.xpose.msra.mxu0 0.0
      %1175 = vmatprep.subr.mxu0 0.0
      %1176 = vmatpush1.xpose.msra.mxu0 0.0
      %1177 = vmatprep.subr.mxu0 0.0
      %1178 = vmatpush1.xpose.msra.mxu0 0.0
      %1179 = vmatprep.subr.mxu0 0.0
      %1180 = vmatpush1.xpose.msra.mxu0 0.0
      %1181 = vmatprep.subr.mxu0 0.0
      %1182 = vmatpush1.xpose.msra.mxu0 0.0
      %1183 = vmatprep.subr.mxu0 0.0
      %1184 = vmatpush1.xpose.msra.mxu0 0.0
      %1185 = vmatprep.subr.mxu0 0.0
      %1186 = vmatpush1.xpose.msra.mxu0 0.0
      %1187 = vmatprep.subr.mxu0 0.0
      %1188 = vmatpush1.xpose.msra.mxu0 0.0
      %1189 = vmatprep.subr.mxu0 0.0
      %1190 = vmatpush1.xpose.msra.mxu0 0.0
      %1191 = vmatprep.subr.mxu0 0.0
      %1192 = vmatpush1.xpose.msra.mxu0 0.0
      %1193 = vmatprep.subr.mxu0 0.0
      %1194 = vmatpush1.xpose.msra.mxu0 0.0
      %1195 = vmatprep.subr.mxu0 0.0
      %1196 = vmatpush1.xpose.msra.mxu0 0.0
      %1197 = vmatprep.subr.mxu0 0.0
      %1198 = vmatpush1.xpose.msra.mxu0 0.0
      %1199 = vmatprep.subr.mxu0 0.0
      %1200 = vmatpush1.xpose.msra.mxu0 0.0
      %1201 = vmatprep.subr.mxu0 0.0
      %1202 = vmatpush1.xpose.msra.mxu0 0.0
      %1203 = vmatprep.subr.mxu0 0.0
      %1204 = vmatpush1.xpose.msra.mxu0 0.0
      %1205 = vmatprep.mubr.f32.mxu0 0.0
      %1206 = vmatmul.mubr.f32.gmra.mrb[0].mxu0 %v1123
      %v1207 = vpop.f32.mrb[0].mxu0
      %v1208 = vadd.f32 0.0, %v1207
      %v1209 = vpop.f32.mrb[0].mxu0
      %1210 = vmatprep.mubr.f32.mxu0 0.0
      %1211 = vmatmul.mubr.f32.gmra.mrb[0].mxu0 %v1125
      %v1212 = vpop.f32.mrb[0].mxu0
      %v1213 = vadd.f32 0.0, %v1212
      %v1214 = vpop.f32.mrb[0].mxu0
      %1215 = vmatprep.mubr.f32.mxu0 0.0
      %1216 = vmatmul.mubr.f32.gmra.mrb[0].mxu0 %v1127
      %v1217 = vpop.f32.mrb[0].mxu0
      %v1218 = vadd.f32 0.0, %v1217
      %v1219 = vpop.f32.mrb[0].mxu0
      %1220 = vmatprep.mubr.f32.mxu0 0.0
      %1221 = vmatmul.mubr.f32.gmra.mrb[0].mxu0 %v1129
      %v1222 = vpop.f32.mrb[0].mxu0
      %v1223 = vadd.f32 0.0, %v1222
      %v1224 = vpop.f32.mrb[0].mxu0
      %1225 = vmatprep.mubr.f32.mxu0 0.0
      %1226 = vmatmul.mubr.f32.gmra.mrb[0].mxu0 %v1131
      %v1227 = vpop.f32.mrb[0].mxu0
      %v1228 = vadd.f32 0.0, %v1227
      %v1229 = vpop.f32.mrb[0].mxu0
      %1230 = vmatprep.mubr.f32.mxu0 0.0
      %1231 = vmatmul.mubr.f32.gmra.mrb[0].mxu0 %v1133
      %v1232 = vpop.f32.mrb[0].mxu0
      %v1233 = vadd.f32 0.0, %v1232
      %v1234 = vpop.f32.mrb[0].mxu0
      %1235 = vmatprep.mubr.f32.mxu0 0.0
      %1236 = vmatmul.mubr.f32.gmra.mrb[0].mxu0 %v1135
      %v1237 = vpop.f32.mrb[0].mxu0
      %v1238 = vadd.f32 0.0, %v1237
      %v1239 = vpop.f32.mrb[0].mxu0
      %1240 = vmatprep.mubr.f32.mxu0 0.0
      %1241 = vmatmul.mubr.f32.gmra.mrb[0].mxu0 %v1137
      %v1242 = vpop.f32.mrb[0].mxu0
      %v1243 = vadd.f32 0.0, %v1242
      %v1244 = vpop.f32.mrb[0].mxu0
      %1245 = vdwg.mxu0
      %v1246 = vmul.f32 %v1208, 0.5
      %v1247 = vmul.f32 %v1213, 0.5
      %v1248 = vmul.f32 %v1218, 0.5
      %v1249 = vmul.f32 %v1223, 0.5
      %v1250 = vmul.f32 %v1228, 0.5
      %v1251 = vmul.f32 %v1233, 0.5
      %v1252 = vmul.f32 %v1238, 0.5
      %v1253 = vmul.f32 %v1243, 0.5
      %v1254 = vsel %vm744, %v1246, -inf
      %1255 = vmax.xlane.f32.xlu0 %v1254
      %v1256 = vpop.xlane.xlu0 %1255
      %v1257 = vsel %vm744, %v1247, -inf
      %1258 = vmax.xlane.f32.xlu0 %v1257
      %v1259 = vpop.xlane.xlu0 %1258
      %v1260 = vsel %vm744, %v1248, -inf
      %1261 = vmax.xlane.f32.xlu0 %v1260
      %v1262 = vpop.xlane.xlu0 %1261
      %v1263 = vsel %vm744, %v1249, -inf
      %1264 = vmax.xlane.f32.xlu0 %v1263
      %v1265 = vpop.xlane.xlu0 %1264
      %v1266 = vsel %vm744, %v1250, -inf
      %1267 = vmax.xlane.f32.xlu0 %v1266
      %v1268 = vpop.xlane.xlu0 %1267
      %v1269 = vsel %vm744, %v1251, -inf
      %1270 = vmax.xlane.f32.xlu0 %v1269
      %v1271 = vpop.xlane.xlu0 %1270
      %v1272 = vsel %vm744, %v1252, -inf
      %1273 = vmax.xlane.f32.xlu0 %v1272
      %v1274 = vpop.xlane.xlu0 %1273
      %v1275 = vsel %vm744, %v1253, -inf
      %1276 = vmax.xlane.f32.xlu0 %v1275
      %v1277 = vpop.xlane.xlu0 %1276
      %v1278 = vsub.f32 %v1246, %v1256
      %v1279 = vsub.f32 %v1247, %v1259
      %v1280 = vsub.f32 %v1248, %v1262
      %v1281 = vsub.f32 %v1249, %v1265
      %v1282 = vsub.f32 %v1250, %v1268
      %v1283 = vsub.f32 %v1251, %v1271
      %v1284 = vsub.f32 %v1252, %v1274
      %v1285 = vsub.f32 %v1253, %v1277
      %v1286 = vmul.f32 %v1278, 1.442695
      %v1287 = vpow.pop %v1286
      %v1288 = vmul.f32 %v1279, 1.442695
      %v1289 = vpow.pop %v1288
      %v1290 = vmul.f32 %v1280, 1.442695
      %v1291 = vpow.pop %v1290
      %v1292 = vmul.f32 %v1281, 1.442695
      %v1293 = vpow.pop %v1292
      %v1294 = vmul.f32 %v1282, 1.442695
      %v1295 = vpow.pop %v1294
      %v1296 = vmul.f32 %v1283, 1.442695
      %v1297 = vpow.pop %v1296
      %v1298 = vmul.f32 %v1284, 1.442695
      %v1299 = vpow.pop %v1298
      %v1300 = vmul.f32 %v1285, 1.442695
      %v1301 = vpow.pop %v1300
      %v1302 = vsel %vm744, %v1287, 0.0
      %1303 = vadd.xlane.f32.xlu0 %v1302
      %v1304 = vpop.xlane.xlu0 %1303
      %v1305 = vsel %vm744, %v1289, 0.0
      %1306 = vadd.xlane.f32.xlu0 %v1305
      %v1307 = vpop.xlane.xlu0 %1306
      %v1308 = vsel %vm744, %v1291, 0.0
      %1309 = vadd.xlane.f32.xlu0 %v1308
      %v1310 = vpop.xlane.xlu0 %1309
      %v1311 = vsel %vm744, %v1293, 0.0
      %1312 = vadd.xlane.f32.xlu0 %v1311
      %v1313 = vpop.xlane.xlu0 %1312
      %v1314 = vsel %vm744, %v1295, 0.0
      %1315 = vadd.xlane.f32.xlu0 %v1314
      %v1316 = vpop.xlane.xlu0 %1315
      %v1317 = vsel %vm744, %v1297, 0.0
      %1318 = vadd.xlane.f32.xlu0 %v1317
      %v1319 = vpop.xlane.xlu0 %1318
      %v1320 = vsel %vm744, %v1299, 0.0
      %1321 = vadd.xlane.f32.xlu0 %v1320
      %v1322 = vpop.xlane.xlu0 %1321
      %v1323 = vsel %vm744, %v1301, 0.0
      %1324 = vadd.xlane.f32.xlu0 %v1323
      %v1325 = vpop.xlane.xlu0 %1324
      %v1326 = vrcp.pop %v1304
      %v1327 = vrcp.pop %v1307
      %v1328 = vrcp.pop %v1310
      %v1329 = vrcp.pop %v1313
      %v1330 = vrcp.pop %v1316
      %v1331 = vrcp.pop %v1319
      %v1332 = vrcp.pop %v1322
      %v1333 = vrcp.pop %v1325
      %v1334 = vmul.f32 %v1287, %v1326
      %v1335 = vmul.f32 %v1289, %v1327
      %v1336 = vmul.f32 %v1291, %v1328
      %v1337 = vmul.f32 %v1293, %v1329
      %v1338 = vmul.f32 %v1295, %v1330
      %v1339 = vmul.f32 %v1297, %v1331
      %v1340 = vmul.f32 %v1299, %v1332
      %v1341 = vmul.f32 %v1301, %v1333
      %1342 = vrot.lane.b32.xlu0 %v737, 88
      %v1343 = vpop.permute.xlu0 %1342
      %v1346 = vsel %vm744, %v1334, 0
      %v1349 = vsel %vm744, %v1335, 0
      %v1352 = vsel %vm744, %v1336, 0
      %v1355 = vsel %vm744, %v1337, 0
      %v1358 = vsel %vm744, %v1338, 0
      %v1361 = vsel %vm744, %v1339, 0
      %v1364 = vsel %vm744, %v1340, 0
      %v1367 = vsel %vm744, %v1341, 0
      %1369 = vmatprep.subr.mxu0 0.0
      %1370 = vmatpush1.msra.mxu0 %v1343
      %1371 = vmatprep.subr.mxu0 0.0
      %1372 = vmatpush1.msra.mxu0 0.0
      %1373 = vmatprep.subr.mxu0 0.0
      %1374 = vmatpush1.msra.mxu0 0.0
      %1375 = vmatprep.subr.mxu0 0.0
      %1376 = vmatpush1.msra.mxu0 0.0
      %1377 = vmatprep.subr.mxu0 0.0
      %1378 = vmatpush1.msra.mxu0 0.0
      %1379 = vmatprep.subr.mxu0 0.0
      %1380 = vmatpush1.msra.mxu0 0.0
      %1381 = vmatprep.subr.mxu0 0.0
      %1382 = vmatpush1.msra.mxu0 0.0
      %1383 = vmatprep.subr.mxu0 0.0
      %1384 = vmatpush1.msra.mxu0 0.0
      %1385 = vmatprep.subr.mxu0 0.0
      %1386 = vmatpush1.msra.mxu0 0.0
      %1387 = vmatprep.subr.mxu0 0.0
      %1388 = vmatpush1.msra.mxu0 0.0
      %1389 = vmatprep.subr.mxu0 0.0
      %1390 = vmatpush1.msra.mxu0 0.0
      %1391 = vmatprep.subr.mxu0 0.0
      %1392 = vmatpush1.msra.mxu0 0.0
      %1393 = vmatprep.subr.mxu0 0.0
      %1394 = vmatpush1.msra.mxu0 0.0
      %1395 = vmatprep.subr.mxu0 0.0
      %1396 = vmatpush1.msra.mxu0 0.0
      %1397 = vmatprep.subr.mxu0 0.0
      %1398 = vmatpush1.msra.mxu0 0.0
      %1399 = vmatprep.subr.mxu0 0.0
      %1400 = vmatpush1.msra.mxu0 0.0
      %1401 = vmatprep.subr.mxu0 0.0
      %1402 = vmatpush1.msra.mxu0 0.0
      %1403 = vmatprep.subr.mxu0 0.0
      %1404 = vmatpush1.msra.mxu0 0.0
      %1405 = vmatprep.subr.mxu0 0.0
      %1406 = vmatpush1.msra.mxu0 0.0
      %1407 = vmatprep.subr.mxu0 0.0
      %1408 = vmatpush1.msra.mxu0 0.0
      %1409 = vmatprep.subr.mxu0 0.0
      %1410 = vmatpush1.msra.mxu0 0.0
      %1411 = vmatprep.subr.mxu0 0.0
      %1412 = vmatpush1.msra.mxu0 0.0
      %1413 = vmatprep.subr.mxu0 0.0
      %1414 = vmatpush1.msra.mxu0 0.0
      %1415 = vmatprep.subr.mxu0 0.0
      %1416 = vmatpush1.msra.mxu0 0.0
      %1417 = vmatprep.subr.mxu0 0.0
      %1418 = vmatpush1.msra.mxu0 0.0
      %1419 = vmatprep.subr.mxu0 0.0
      %1420 = vmatpush1.msra.mxu0 0.0
      %1421 = vmatprep.subr.mxu0 0.0
      %1422 = vmatpush1.msra.mxu0 0.0
      %1423 = vmatprep.subr.mxu0 0.0
      %1424 = vmatpush1.msra.mxu0 0.0
      %1425 = vmatprep.subr.mxu0 0.0
      %1426 = vmatpush1.msra.mxu0 0.0
      %1427 = vmatprep.subr.mxu0 0.0
      %1428 = vmatpush1.msra.mxu0 0.0
      %1429 = vmatprep.subr.mxu0 0.0
      %1430 = vmatpush1.msra.mxu0 0.0
      %1431 = vmatprep.subr.mxu0 0.0
      %1432 = vmatpush1.msra.mxu0 0.0
      %1433 = vmatprep.mubr.f32.mxu0 0.0
      %1434 = vmatmul.mubr.f32.gmra.mrb[0].mxu0 %v1346
      %v1435 = vpop.f32.mrb[0].mxu0
      %v1436 = vadd.f32 0.0, %v1435
      %v1437 = vpop.f32.mrb[0].mxu0
      %1438 = vmatprep.mubr.f32.mxu0 0.0
      %1439 = vmatmul.mubr.f32.gmra.mrb[0].mxu0 %v1349
      %v1440 = vpop.f32.mrb[0].mxu0
      %v1441 = vadd.f32 0.0, %v1440
      %v1442 = vpop.f32.mrb[0].mxu0
      %1443 = vmatprep.mubr.f32.mxu0 0.0
      %1444 = vmatmul.mubr.f32.gmra.mrb[0].mxu0 %v1352
      %v1445 = vpop.f32.mrb[0].mxu0
      %v1446 = vadd.f32 0.0, %v1445
      %v1447 = vpop.f32.mrb[0].mxu0
      %1448 = vmatprep.mubr.f32.mxu0 0.0
      %1449 = vmatmul.mubr.f32.gmra.mrb[0].mxu0 %v1355
      %v1450 = vpop.f32.mrb[0].mxu0
      %v1451 = vadd.f32 0.0, %v1450
      %v1452 = vpop.f32.mrb[0].mxu0
      %1453 = vmatprep.mubr.f32.mxu0 0.0
      %1454 = vmatmul.mubr.f32.gmra.mrb[0].mxu0 %v1358
      %v1455 = vpop.f32.mrb[0].mxu0
      %v1456 = vadd.f32 0.0, %v1455
      %v1457 = vpop.f32.mrb[0].mxu0
      %1458 = vmatprep.mubr.f32.mxu0 0.0
      %1459 = vmatmul.mubr.f32.gmra.mrb[0].mxu0 %v1361
      %v1460 = vpop.f32.mrb[0].mxu0
      %v1461 = vadd.f32 0.0, %v1460
      %v1462 = vpop.f32.mrb[0].mxu0
      %1463 = vmatprep.mubr.f32.mxu0 0.0
      %1464 = vmatmul.mubr.f32.gmra.mrb[0].mxu0 %v1364
      %v1465 = vpop.f32.mrb[0].mxu0
      %v1466 = vadd.f32 0.0, %v1465
      %v1467 = vpop.f32.mrb[0].mxu0
      %1468 = vmatprep.mubr.f32.mxu0 0.0
      %1469 = vmatmul.mubr.f32.gmra.mrb[0].mxu0 %v1367
      %v1470 = vpop.f32.mrb[0].mxu0
      %v1471 = vadd.f32 0.0, %v1470
      %v1472 = vpop.f32.mrb[0].mxu0
      %1473 = vdwg.mxu0
      %v1475 = vsel %vm744, %v1436, 0
      %v1478 = vsel %vm744, %v1441, 0
      %v1481 = vsel %vm744, %v1446, 0
      %v1484 = vsel %vm744, %v1451, 0
      %v1487 = vsel %vm744, %v1456, 0
      %v1490 = vsel %vm744, %v1461, 0
      %v1493 = vsel %vm744, %v1466, 0
      %v1496 = vsel %vm744, %v1471, 0
      %1498 = vmatprep.subr.mxu0 0.0
      %1499 = vmatpush1.msra.mxu0 %v741
      %1500 = vmatprep.subr.mxu0 0.0
      %1501 = vmatpush1.msra.mxu0 0.0
      %1502 = vmatprep.subr.mxu0 0.0
      %1503 = vmatpush1.msra.mxu0 0.0
      %1504 = vmatprep.subr.mxu0 0.0
      %1505 = vmatpush1.msra.mxu0 0.0
      %1506 = vmatprep.subr.mxu0 0.0
      %1507 = vmatpush1.msra.mxu0 0.0
      %1508 = vmatprep.subr.mxu0 0.0
      %1509 = vmatpush1.msra.mxu0 0.0
      %1510 = vmatprep.subr.mxu0 0.0
      %1511 = vmatpush1.msra.mxu0 0.0
      %1512 = vmatprep.subr.mxu0 0.0
      %1513 = vmatpush1.msra.mxu0 0.0
      %1514 = vmatprep.subr.mxu0 0.0
      %1515 = vmatpush1.msra.mxu0 0.0
      %1516 = vmatprep.subr.mxu0 0.0
      %1517 = vmatpush1.msra.mxu0 0.0
      %1518 = vmatprep.subr.mxu0 0.0
      %1519 = vmatpush1.msra.mxu0 0.0
      %1520 = vmatprep.subr.mxu0 0.0
      %1521 = vmatpush1.msra.mxu0 0.0
      %1522 = vmatprep.subr.mxu0 0.0
      %1523 = vmatpush1.msra.mxu0 0.0
      %1524 = vmatprep.subr.mxu0 0.0
      %1525 = vmatpush1.msra.mxu0 0.0
      %1526 = vmatprep.subr.mxu0 0.0
      %1527 = vmatpush1.msra.mxu0 0.0
      %1528 = vmatprep.subr.mxu0 0.0
      %1529 = vmatpush1.msra.mxu0 0.0
      %1530 = vmatprep.subr.mxu0 0.0
      %1531 = vmatpush1.msra.mxu0 0.0
      %1532 = vmatprep.subr.mxu0 0.0
      %1533 = vmatpush1.msra.mxu0 0.0
      %1534 = vmatprep.subr.mxu0 0.0
      %1535 = vmatpush1.msra.mxu0 0.0
      %1536 = vmatprep.subr.mxu0 0.0
      %1537 = vmatpush1.msra.mxu0 0.0
      %1538 = vmatprep.subr.mxu0 0.0
      %1539 = vmatpush1.msra.mxu0 0.0
      %1540 = vmatprep.subr.mxu0 0.0
      %1541 = vmatpush1.msra.mxu0 0.0
      %1542 = vmatprep.subr.mxu0 0.0
      %1543 = vmatpush1.msra.mxu0 0.0
      %1544 = vmatprep.subr.mxu0 0.0
      %1545 = vmatpush1.msra.mxu0 0.0
      %1546 = vmatprep.subr.mxu0 0.0
      %1547 = vmatpush1.msra.mxu0 0.0
      %1548 = vmatprep.subr.mxu0 0.0
      %1549 = vmatpush1.msra.mxu0 0.0
      %1550 = vmatprep.subr.mxu0 0.0
      %1551 = vmatpush1.msra.mxu0 0.0
      %1552 = vmatprep.subr.mxu0 0.0
      %1553 = vmatpush1.msra.mxu0 0.0
      %1554 = vmatprep.subr.mxu0 0.0
      %1555 = vmatpush1.msra.mxu0 0.0
      %1556 = vmatprep.subr.mxu0 0.0
      %1557 = vmatpush1.msra.mxu0 0.0
      %1558 = vmatprep.subr.mxu0 0.0
      %1559 = vmatpush1.msra.mxu0 0.0
      %1560 = vmatprep.subr.mxu0 0.0
      %1561 = vmatpush1.msra.mxu0 0.0
      %1562 = vmatprep.mubr.f32.mxu0 0.0
      %1563 = vmatmul.mubr.f32.gmra.mrb[0].mxu0 %v1475
      %v1564 = vpop.f32.mrb[0].mxu0
      %v1565 = vadd.f32 0.0, %v1564
      %v1566 = vpop.f32.mrb[0].mxu0
      %1567 = vmatprep.mubr.f32.mxu0 0.0
      %1568 = vmatmul.mubr.f32.gmra.mrb[0].mxu0 %v1478
      %v1569 = vpop.f32.mrb[0].mxu0
      %v1570 = vadd.f32 0.0, %v1569
      %v1571 = vpop.f32.mrb[0].mxu0
      %1572 = vmatprep.mubr.f32.mxu0 0.0
      %1573 = vmatmul.mubr.f32.gmra.mrb[0].mxu0 %v1481
      %v1574 = vpop.f32.mrb[0].mxu0
      %v1575 = vadd.f32 0.0, %v1574
      %v1576 = vpop.f32.mrb[0].mxu0
      %1577 = vmatprep.mubr.f32.mxu0 0.0
      %1578 = vmatmul.mubr.f32.gmra.mrb[0].mxu0 %v1484
      %v1579 = vpop.f32.mrb[0].mxu0
      %v1580 = vadd.f32 0.0, %v1579
      %v1581 = vpop.f32.mrb[0].mxu0
      %1582 = vmatprep.mubr.f32.mxu0 0.0
      %1583 = vmatmul.mubr.f32.gmra.mrb[0].mxu0 %v1487
      %v1584 = vpop.f32.mrb[0].mxu0
      %v1585 = vadd.f32 0.0, %v1584
      %v1586 = vpop.f32.mrb[0].mxu0
      %1587 = vmatprep.mubr.f32.mxu0 0.0
      %1588 = vmatmul.mubr.f32.gmra.mrb[0].mxu0 %v1490
      %v1589 = vpop.f32.mrb[0].mxu0
      %v1590 = vadd.f32 0.0, %v1589
      %v1591 = vpop.f32.mrb[0].mxu0
      %1592 = vmatprep.mubr.f32.mxu0 0.0
      %1593 = vmatmul.mubr.f32.gmra.mrb[0].mxu0 %v1493
      %v1594 = vpop.f32.mrb[0].mxu0
      %v1595 = vadd.f32 0.0, %v1594
      %v1596 = vpop.f32.mrb[0].mxu0
      %1597 = vmatprep.mubr.f32.mxu0 0.0
      %1598 = vmatmul.mubr.f32.gmra.mrb[0].mxu0 %v1496
      %v1599 = vpop.f32.mrb[0].mxu0
      %v1600 = vadd.f32 0.0, %v1599
      %v1601 = vpop.f32.mrb[0].mxu0
      %1602 = vdwg.mxu0
      %v1604 = vsel %vm744, %v1067, 0
      %v1607 = vsel %vm744, %v1072, 0
      %v1610 = vsel %vm744, %v1077, 0
      %v1613 = vsel %vm744, %v1082, 0
      %v1616 = vsel %vm744, %v1087, 0
      %v1619 = vsel %vm744, %v1092, 0
      %v1622 = vsel %vm744, %v1097, 0
      %v1625 = vsel %vm744, %v1102, 0
      %1627 = vmatprep.subr.mxu0 0.0
      %1628 = vmatpush1.msra.mxu0 %v740
      %1629 = vmatprep.subr.mxu0 0.0
      %1630 = vmatpush1.msra.mxu0 0.0
      %1631 = vmatprep.subr.mxu0 0.0
      %1632 = vmatpush1.msra.mxu0 0.0
      %1633 = vmatprep.subr.mxu0 0.0
      %1634 = vmatpush1.msra.mxu0 0.0
      %1635 = vmatprep.subr.mxu0 0.0
      %1636 = vmatpush1.msra.mxu0 0.0
      %1637 = vmatprep.subr.mxu0 0.0
      %1638 = vmatpush1.msra.mxu0 0.0
      %1639 = vmatprep.subr.mxu0 0.0
      %1640 = vmatpush1.msra.mxu0 0.0
      %1641 = vmatprep.subr.mxu0 0.0
      %1642 = vmatpush1.msra.mxu0 0.0
      %1643 = vmatprep.subr.mxu0 0.0
      %1644 = vmatpush1.msra.mxu0 0.0
      %1645 = vmatprep.subr.mxu0 0.0
      %1646 = vmatpush1.msra.mxu0 0.0
      %1647 = vmatprep.subr.mxu0 0.0
      %1648 = vmatpush1.msra.mxu0 0.0
      %1649 = vmatprep.subr.mxu0 0.0
      %1650 = vmatpush1.msra.mxu0 0.0
      %1651 = vmatprep.subr.mxu0 0.0
      %1652 = vmatpush1.msra.mxu0 0.0
      %1653 = vmatprep.subr.mxu0 0.0
      %1654 = vmatpush1.msra.mxu0 0.0
      %1655 = vmatprep.subr.mxu0 0.0
      %1656 = vmatpush1.msra.mxu0 0.0
      %1657 = vmatprep.subr.mxu0 0.0
      %1658 = vmatpush1.msra.mxu0 0.0
      %1659 = vmatprep.subr.mxu0 0.0
      %1660 = vmatpush1.msra.mxu0 0.0
      %1661 = vmatprep.subr.mxu0 0.0
      %1662 = vmatpush1.msra.mxu0 0.0
      %1663 = vmatprep.subr.mxu0 0.0
      %1664 = vmatpush1.msra.mxu0 0.0
      %1665 = vmatprep.subr.mxu0 0.0
      %1666 = vmatpush1.msra.mxu0 0.0
      %1667 = vmatprep.subr.mxu0 0.0
      %1668 = vmatpush1.msra.mxu0 0.0
      %1669 = vmatprep.subr.mxu0 0.0
      %1670 = vmatpush1.msra.mxu0 0.0
      %1671 = vmatprep.subr.mxu0 0.0
      %1672 = vmatpush1.msra.mxu0 0.0
      %1673 = vmatprep.subr.mxu0 0.0
      %1674 = vmatpush1.msra.mxu0 0.0
      %1675 = vmatprep.subr.mxu0 0.0
      %1676 = vmatpush1.msra.mxu0 0.0
      %1677 = vmatprep.subr.mxu0 0.0
      %1678 = vmatpush1.msra.mxu0 0.0
      %1679 = vmatprep.subr.mxu0 0.0
      %1680 = vmatpush1.msra.mxu0 0.0
      %1681 = vmatprep.subr.mxu0 0.0
      %1682 = vmatpush1.msra.mxu0 0.0
      %1683 = vmatprep.subr.mxu0 0.0
      %1684 = vmatpush1.msra.mxu0 0.0
      %1685 = vmatprep.subr.mxu0 0.0
      %1686 = vmatpush1.msra.mxu0 0.0
      %1687 = vmatprep.subr.mxu0 0.0
      %1688 = vmatpush1.msra.mxu0 0.0
      %1689 = vmatprep.subr.mxu0 0.0
      %1690 = vmatpush1.msra.mxu0 0.0
      %1691 = vmatprep.mubr.f32.mxu0 0.0
      %1692 = vmatmul.mubr.f32.gmra.mrb[0].mxu0 %v1604
      %v1693 = vpop.f32.mrb[0].mxu0
      %v1694 = vadd.f32 %v1565, %v1693
      %v1695 = vpop.f32.mrb[0].mxu0
      %1696 = vmatprep.mubr.f32.mxu0 0.0
      %1697 = vmatmul.mubr.f32.gmra.mrb[0].mxu0 %v1607
      %v1698 = vpop.f32.mrb[0].mxu0
      %v1699 = vadd.f32 %v1570, %v1698
      %v1700 = vpop.f32.mrb[0].mxu0
      %1701 = vmatprep.mubr.f32.mxu0 0.0
      %1702 = vmatmul.mubr.f32.gmra.mrb[0].mxu0 %v1610
      %v1703 = vpop.f32.mrb[0].mxu0
      %v1704 = vadd.f32 %v1575, %v1703
      %v1705 = vpop.f32.mrb[0].mxu0
      %1706 = vmatprep.mubr.f32.mxu0 0.0
      %1707 = vmatmul.mubr.f32.gmra.mrb[0].mxu0 %v1613
      %v1708 = vpop.f32.mrb[0].mxu0
      %v1709 = vadd.f32 %v1580, %v1708
      %v1710 = vpop.f32.mrb[0].mxu0
      %1711 = vmatprep.mubr.f32.mxu0 0.0
      %1712 = vmatmul.mubr.f32.gmra.mrb[0].mxu0 %v1616
      %v1713 = vpop.f32.mrb[0].mxu0
      %v1714 = vadd.f32 %v1585, %v1713
      %v1715 = vpop.f32.mrb[0].mxu0
      %1716 = vmatprep.mubr.f32.mxu0 0.0
      %1717 = vmatmul.mubr.f32.gmra.mrb[0].mxu0 %v1619
      %v1718 = vpop.f32.mrb[0].mxu0
      %v1719 = vadd.f32 %v1590, %v1718
      %v1720 = vpop.f32.mrb[0].mxu0
      %1721 = vmatprep.mubr.f32.mxu0 0.0
      %1722 = vmatmul.mubr.f32.gmra.mrb[0].mxu0 %v1622
      %v1723 = vpop.f32.mrb[0].mxu0
      %v1724 = vadd.f32 %v1595, %v1723
      %v1725 = vpop.f32.mrb[0].mxu0
      %1726 = vmatprep.mubr.f32.mxu0 0.0
      %1727 = vmatmul.mubr.f32.gmra.mrb[0].mxu0 %v1625
      %v1728 = vpop.f32.mrb[0].mxu0
      %v1729 = vadd.f32 %v1600, %v1728
      %v1730 = vpop.f32.mrb[0].mxu0
      %1731 = vdwg.mxu0
      %1732 = vrot.lane.b32.xlu0 %v484, 112
      %v1733 = vpop.permute.xlu0 %1732
      %1734 = vrot.lane.b32.xlu0 %v489, 112
      %v1735 = vpop.permute.xlu0 %1734
      %1736 = vrot.lane.b32.xlu0 %v494, 112
      %v1737 = vpop.permute.xlu0 %1736
      %1738 = vrot.lane.b32.xlu0 %v499, 112
      %v1739 = vpop.permute.xlu0 %1738
      %1740 = vrot.lane.b32.xlu0 %v504, 112
      %v1741 = vpop.permute.xlu0 %1740
      %1742 = vrot.lane.b32.xlu0 %v509, 112
      %v1743 = vpop.permute.xlu0 %1742
      %1744 = vrot.lane.b32.xlu0 %v514, 112
      %v1745 = vpop.permute.xlu0 %1744
      %1746 = vrot.lane.b32.xlu0 %v519, 112
      %v1747 = vpop.permute.xlu0 %1746
      %1748 = vrot.lane.b32.xlu0 %v737, 112
      %v1749 = vpop.permute.xlu0 %1748
      %v1750 = vsel %vm744, %v1733, 0
      %v1752 = vsel %vm744, %v1735, 0
      %v1754 = vsel %vm744, %v1737, 0
      %v1756 = vsel %vm744, %v1739, 0
      %v1758 = vsel %vm744, %v1741, 0
      %v1760 = vsel %vm744, %v1743, 0
      %v1762 = vsel %vm744, %v1745, 0
      %v1764 = vsel %vm744, %v1747, 0
      %v1766 = vsel %vm744, %v1749, 0
      %1768 = vmatprep.subr.mxu0 0.0
      %1769 = vmatpush1.xpose.msra.mxu0 %v1766
      %1770 = vmatprep.subr.mxu0 0.0
      %1771 = vmatpush1.xpose.msra.mxu0 0.0
      %1772 = vmatprep.subr.mxu0 0.0
      %1773 = vmatpush1.xpose.msra.mxu0 0.0
      %1774 = vmatprep.subr.mxu0 0.0
      %1775 = vmatpush1.xpose.msra.mxu0 0.0
      %1776 = vmatprep.subr.mxu0 0.0
      %1777 = vmatpush1.xpose.msra.mxu0 0.0
      %1778 = vmatprep.subr.mxu0 0.0
      %1779 = vmatpush1.xpose.msra.mxu0 0.0
      %1780 = vmatprep.subr.mxu0 0.0
      %1781 = vmatpush1.xpose.msra.mxu0 0.0
      %1782 = vmatprep.subr.mxu0 0.0
      %1783 = vmatpush1.xpose.msra.mxu0 0.0
      %1784 = vmatprep.subr.mxu0 0.0
      %1785 = vmatpush1.xpose.msra.mxu0 0.0
      %1786 = vmatprep.subr.mxu0 0.0
      %1787 = vmatpush1.xpose.msra.mxu0 0.0
      %1788 = vmatprep.subr.mxu0 0.0
      %1789 = vmatpush1.xpose.msra.mxu0 0.0
      %1790 = vmatprep.subr.mxu0 0.0
      %1791 = vmatpush1.xpose.msra.mxu0 0.0
      %1792 = vmatprep.subr.mxu0 0.0
      %1793 = vmatpush1.xpose.msra.mxu0 0.0
      %1794 = vmatprep.subr.mxu0 0.0
      %1795 = vmatpush1.xpose.msra.mxu0 0.0
      %1796 = vmatprep.subr.mxu0 0.0
      %1797 = vmatpush1.xpose.msra.mxu0 0.0
      %1798 = vmatprep.subr.mxu0 0.0
      %1799 = vmatpush1.xpose.msra.mxu0 0.0
      %1800 = vmatprep.subr.mxu0 0.0
      %1801 = vmatpush1.xpose.msra.mxu0 0.0
      %1802 = vmatprep.subr.mxu0 0.0
      %1803 = vmatpush1.xpose.msra.mxu0 0.0
      %1804 = vmatprep.subr.mxu0 0.0
      %1805 = vmatpush1.xpose.msra.mxu0 0.0
      %1806 = vmatprep.subr.mxu0 0.0
      %1807 = vmatpush1.xpose.msra.mxu0 0.0
      %1808 = vmatprep.subr.mxu0 0.0
      %1809 = vmatpush1.xpose.msra.mxu0 0.0
      %1810 = vmatprep.subr.mxu0 0.0
      %1811 = vmatpush1.xpose.msra.mxu0 0.0
      %1812 = vmatprep.subr.mxu0 0.0
      %1813 = vmatpush1.xpose.msra.mxu0 0.0
      %1814 = vmatprep.subr.mxu0 0.0
      %1815 = vmatpush1.xpose.msra.mxu0 0.0
      %1816 = vmatprep.subr.mxu0 0.0
      %1817 = vmatpush1.xpose.msra.mxu0 0.0
      %1818 = vmatprep.subr.mxu0 0.0
      %1819 = vmatpush1.xpose.msra.mxu0 0.0
      %1820 = vmatprep.subr.mxu0 0.0
      %1821 = vmatpush1.xpose.msra.mxu0 0.0
      %1822 = vmatprep.subr.mxu0 0.0
      %1823 = vmatpush1.xpose.msra.mxu0 0.0
      %1824 = vmatprep.subr.mxu0 0.0
      %1825 = vmatpush1.xpose.msra.mxu0 0.0
      %1826 = vmatprep.subr.mxu0 0.0
      %1827 = vmatpush1.xpose.msra.mxu0 0.0
      %1828 = vmatprep.subr.mxu0 0.0
      %1829 = vmatpush1.xpose.msra.mxu0 0.0
      %1830 = vmatprep.subr.mxu0 0.0
      %1831 = vmatpush1.xpose.msra.mxu0 0.0
      %1832 = vmatprep.mubr.f32.mxu0 0.0
      %1833 = vmatmul.mubr.f32.gmra.mrb[0].mxu0 %v1750
      %v1834 = vpop.f32.mrb[0].mxu0
      %v1835 = vadd.f32 0.0, %v1834
      %v1836 = vpop.f32.mrb[0].mxu0
      %1837 = vmatprep.mubr.f32.mxu0 0.0
      %1838 = vmatmul.mubr.f32.gmra.mrb[0].mxu0 %v1752
      %v1839 = vpop.f32.mrb[0].mxu0
      %v1840 = vadd.f32 0.0, %v1839
      %v1841 = vpop.f32.mrb[0].mxu0
      %1842 = vmatprep.mubr.f32.mxu0 0.0
      %1843 = vmatmul.mubr.f32.gmra.mrb[0].mxu0 %v1754
      %v1844 = vpop.f32.mrb[0].mxu0
      %v1845 = vadd.f32 0.0, %v1844
      %v1846 = vpop.f32.mrb[0].mxu0
      %1847 = vmatprep.mubr.f32.mxu0 0.0
      %1848 = vmatmul.mubr.f32.gmra.mrb[0].mxu0 %v1756
      %v1849 = vpop.f32.mrb[0].mxu0
      %v1850 = vadd.f32 0.0, %v1849
      %v1851 = vpop.f32.mrb[0].mxu0
      %1852 = vmatprep.mubr.f32.mxu0 0.0
      %1853 = vmatmul.mubr.f32.gmra.mrb[0].mxu0 %v1758
      %v1854 = vpop.f32.mrb[0].mxu0
      %v1855 = vadd.f32 0.0, %v1854
      %v1856 = vpop.f32.mrb[0].mxu0
      %1857 = vmatprep.mubr.f32.mxu0 0.0
      %1858 = vmatmul.mubr.f32.gmra.mrb[0].mxu0 %v1760
      %v1859 = vpop.f32.mrb[0].mxu0
      %v1860 = vadd.f32 0.0, %v1859
      %v1861 = vpop.f32.mrb[0].mxu0
      %1862 = vmatprep.mubr.f32.mxu0 0.0
      %1863 = vmatmul.mubr.f32.gmra.mrb[0].mxu0 %v1762
      %v1864 = vpop.f32.mrb[0].mxu0
      %v1865 = vadd.f32 0.0, %v1864
      %v1866 = vpop.f32.mrb[0].mxu0
      %1867 = vmatprep.mubr.f32.mxu0 0.0
      %1868 = vmatmul.mubr.f32.gmra.mrb[0].mxu0 %v1764
      %v1869 = vpop.f32.mrb[0].mxu0
      %v1870 = vadd.f32 0.0, %v1869
      %v1871 = vpop.f32.mrb[0].mxu0
      %1872 = vdwg.mxu0
      %v1873 = vmul.f32 %v1835, 0.5
      %v1874 = vmul.f32 %v1840, 0.5
      %v1875 = vmul.f32 %v1845, 0.5
      %v1876 = vmul.f32 %v1850, 0.5
      %v1877 = vmul.f32 %v1855, 0.5
      %v1878 = vmul.f32 %v1860, 0.5
      %v1879 = vmul.f32 %v1865, 0.5
      %v1880 = vmul.f32 %v1870, 0.5
      %v1881 = vsel %vm744, %v1873, -inf
      %1882 = vmax.xlane.f32.xlu0 %v1881
      %v1883 = vpop.xlane.xlu0 %1882
      %v1884 = vsel %vm744, %v1874, -inf
      %1885 = vmax.xlane.f32.xlu0 %v1884
      %v1886 = vpop.xlane.xlu0 %1885
      %v1887 = vsel %vm744, %v1875, -inf
      %1888 = vmax.xlane.f32.xlu0 %v1887
      %v1889 = vpop.xlane.xlu0 %1888
      %v1890 = vsel %vm744, %v1876, -inf
      %1891 = vmax.xlane.f32.xlu0 %v1890
      %v1892 = vpop.xlane.xlu0 %1891
      %v1893 = vsel %vm744, %v1877, -inf
      %1894 = vmax.xlane.f32.xlu0 %v1893
      %v1895 = vpop.xlane.xlu0 %1894
      %v1896 = vsel %vm744, %v1878, -inf
      %1897 = vmax.xlane.f32.xlu0 %v1896
      %v1898 = vpop.xlane.xlu0 %1897
      %v1899 = vsel %vm744, %v1879, -inf
      %1900 = vmax.xlane.f32.xlu0 %v1899
      %v1901 = vpop.xlane.xlu0 %1900
      %v1902 = vsel %vm744, %v1880, -inf
      %1903 = vmax.xlane.f32.xlu0 %v1902
      %v1904 = vpop.xlane.xlu0 %1903
      %v1905 = vsub.f32 %v1873, %v1883
      %v1906 = vsub.f32 %v1874, %v1886
      %v1907 = vsub.f32 %v1875, %v1889
      %v1908 = vsub.f32 %v1876, %v1892
      %v1909 = vsub.f32 %v1877, %v1895
      %v1910 = vsub.f32 %v1878, %v1898
      %v1911 = vsub.f32 %v1879, %v1901
      %v1912 = vsub.f32 %v1880, %v1904
      %v1913 = vmul.f32 %v1905, 1.442695
      %v1914 = vpow.pop %v1913
      %v1915 = vmul.f32 %v1906, 1.442695
      %v1916 = vpow.pop %v1915
      %v1917 = vmul.f32 %v1907, 1.442695
      %v1918 = vpow.pop %v1917
      %v1919 = vmul.f32 %v1908, 1.442695
      %v1920 = vpow.pop %v1919
      %v1921 = vmul.f32 %v1909, 1.442695
      %v1922 = vpow.pop %v1921
      %v1923 = vmul.f32 %v1910, 1.442695
      %v1924 = vpow.pop %v1923
      %v1925 = vmul.f32 %v1911, 1.442695
      %v1926 = vpow.pop %v1925
      %v1927 = vmul.f32 %v1912, 1.442695
      %v1928 = vpow.pop %v1927
      %v1929 = vsel %vm744, %v1914, 0.0
      %1930 = vadd.xlane.f32.xlu0 %v1929
      %v1931 = vpop.xlane.xlu0 %1930
      %v1932 = vsel %vm744, %v1916, 0.0
      %1933 = vadd.xlane.f32.xlu0 %v1932
      %v1934 = vpop.xlane.xlu0 %1933
      %v1935 = vsel %vm744, %v1918, 0.0
      %1936 = vadd.xlane.f32.xlu0 %v1935
      %v1937 = vpop.xlane.xlu0 %1936
      %v1938 = vsel %vm744, %v1920, 0.0
      %1939 = vadd.xlane.f32.xlu0 %v1938
      %v1940 = vpop.xlane.xlu0 %1939
      %v1941 = vsel %vm744, %v1922, 0.0
      %1942 = vadd.xlane.f32.xlu0 %v1941
      %v1943 = vpop.xlane.xlu0 %1942
      %v1944 = vsel %vm744, %v1924, 0.0
      %1945 = vadd.xlane.f32.xlu0 %v1944
      %v1946 = vpop.xlane.xlu0 %1945
      %v1947 = vsel %vm744, %v1926, 0.0
      %1948 = vadd.xlane.f32.xlu0 %v1947
      %v1949 = vpop.xlane.xlu0 %1948
      %v1950 = vsel %vm744, %v1928, 0.0
      %1951 = vadd.xlane.f32.xlu0 %v1950
      %v1952 = vpop.xlane.xlu0 %1951
      %v1953 = vrcp.pop %v1931
      %v1954 = vrcp.pop %v1934
      %v1955 = vrcp.pop %v1937
      %v1956 = vrcp.pop %v1940
      %v1957 = vrcp.pop %v1943
      %v1958 = vrcp.pop %v1946
      %v1959 = vrcp.pop %v1949
      %v1960 = vrcp.pop %v1952
      %v1961 = vmul.f32 %v1914, %v1953
      %v1962 = vmul.f32 %v1916, %v1954
      %v1963 = vmul.f32 %v1918, %v1955
      %v1964 = vmul.f32 %v1920, %v1956
      %v1965 = vmul.f32 %v1922, %v1957
      %v1966 = vmul.f32 %v1924, %v1958
      %v1967 = vmul.f32 %v1926, %v1959
      %v1968 = vmul.f32 %v1928, %v1960
      %1969 = vrot.lane.b32.xlu0 %v737, 80
      %v1970 = vpop.permute.xlu0 %1969
      %v1973 = vsel %vm744, %v1961, 0
      %v1976 = vsel %vm744, %v1962, 0
      %v1979 = vsel %vm744, %v1963, 0
      %v1982 = vsel %vm744, %v1964, 0
      %v1985 = vsel %vm744, %v1965, 0
      %v1988 = vsel %vm744, %v1966, 0
      %v1991 = vsel %vm744, %v1967, 0
      %v1994 = vsel %vm744, %v1968, 0
      %1996 = vmatprep.subr.mxu0 0.0
      %1997 = vmatpush1.msra.mxu0 %v1970
      %1998 = vmatprep.subr.mxu0 0.0
      %1999 = vmatpush1.msra.mxu0 0.0
      %2000 = vmatprep.subr.mxu0 0.0
      %2001 = vmatpush1.msra.mxu0 0.0
      %2002 = vmatprep.subr.mxu0 0.0
      %2003 = vmatpush1.msra.mxu0 0.0
      %2004 = vmatprep.subr.mxu0 0.0
      %2005 = vmatpush1.msra.mxu0 0.0
      %2006 = vmatprep.subr.mxu0 0.0
      %2007 = vmatpush1.msra.mxu0 0.0
      %2008 = vmatprep.subr.mxu0 0.0
      %2009 = vmatpush1.msra.mxu0 0.0
      %2010 = vmatprep.subr.mxu0 0.0
      %2011 = vmatpush1.msra.mxu0 0.0
      %2012 = vmatprep.subr.mxu0 0.0
      %2013 = vmatpush1.msra.mxu0 0.0
      %2014 = vmatprep.subr.mxu0 0.0
      %2015 = vmatpush1.msra.mxu0 0.0
      %2016 = vmatprep.subr.mxu0 0.0
      %2017 = vmatpush1.msra.mxu0 0.0
      %2018 = vmatprep.subr.mxu0 0.0
      %2019 = vmatpush1.msra.mxu0 0.0
      %2020 = vmatprep.subr.mxu0 0.0
      %2021 = vmatpush1.msra.mxu0 0.0
      %2022 = vmatprep.subr.mxu0 0.0
      %2023 = vmatpush1.msra.mxu0 0.0
      %2024 = vmatprep.subr.mxu0 0.0
      %2025 = vmatpush1.msra.mxu0 0.0
      %2026 = vmatprep.subr.mxu0 0.0
      %2027 = vmatpush1.msra.mxu0 0.0
      %2028 = vmatprep.subr.mxu0 0.0
      %2029 = vmatpush1.msra.mxu0 0.0
      %2030 = vmatprep.subr.mxu0 0.0
      %2031 = vmatpush1.msra.mxu0 0.0
      %2032 = vmatprep.subr.mxu0 0.0
      %2033 = vmatpush1.msra.mxu0 0.0
      %2034 = vmatprep.subr.mxu0 0.0
      %2035 = vmatpush1.msra.mxu0 0.0
      %2036 = vmatprep.subr.mxu0 0.0
      %2037 = vmatpush1.msra.mxu0 0.0
      %2038 = vmatprep.subr.mxu0 0.0
      %2039 = vmatpush1.msra.mxu0 0.0
      %2040 = vmatprep.subr.mxu0 0.0
      %2041 = vmatpush1.msra.mxu0 0.0
      %2042 = vmatprep.subr.mxu0 0.0
      %2043 = vmatpush1.msra.mxu0 0.0
      %2044 = vmatprep.subr.mxu0 0.0
      %2045 = vmatpush1.msra.mxu0 0.0
      %2046 = vmatprep.subr.mxu0 0.0
      %2047 = vmatpush1.msra.mxu0 0.0
      %2048 = vmatprep.subr.mxu0 0.0
      %2049 = vmatpush1.msra.mxu0 0.0
      %2050 = vmatprep.subr.mxu0 0.0
      %2051 = vmatpush1.msra.mxu0 0.0
      %2052 = vmatprep.subr.mxu0 0.0
      %2053 = vmatpush1.msra.mxu0 0.0
      %2054 = vmatprep.subr.mxu0 0.0
      %2055 = vmatpush1.msra.mxu0 0.0
      %2056 = vmatprep.subr.mxu0 0.0
      %2057 = vmatpush1.msra.mxu0 0.0
      %2058 = vmatprep.subr.mxu0 0.0
      %2059 = vmatpush1.msra.mxu0 0.0
      %2060 = vmatprep.mubr.f32.mxu0 0.0
      %2061 = vmatmul.mubr.f32.gmra.mrb[0].mxu0 %v1973
      %v2062 = vpop.f32.mrb[0].mxu0
      %v2063 = vadd.f32 0.0, %v2062
      %v2064 = vpop.f32.mrb[0].mxu0
      %2065 = vmatprep.mubr.f32.mxu0 0.0
      %2066 = vmatmul.mubr.f32.gmra.mrb[0].mxu0 %v1976
      %v2067 = vpop.f32.mrb[0].mxu0
      %v2068 = vadd.f32 0.0, %v2067
      %v2069 = vpop.f32.mrb[0].mxu0
      %2070 = vmatprep.mubr.f32.mxu0 0.0
      %2071 = vmatmul.mubr.f32.gmra.mrb[0].mxu0 %v1979
      %v2072 = vpop.f32.mrb[0].mxu0
      %v2073 = vadd.f32 0.0, %v2072
      %v2074 = vpop.f32.mrb[0].mxu0
      %2075 = vmatprep.mubr.f32.mxu0 0.0
      %2076 = vmatmul.mubr.f32.gmra.mrb[0].mxu0 %v1982
      %v2077 = vpop.f32.mrb[0].mxu0
      %v2078 = vadd.f32 0.0, %v2077
      %v2079 = vpop.f32.mrb[0].mxu0
      %2080 = vmatprep.mubr.f32.mxu0 0.0
      %2081 = vmatmul.mubr.f32.gmra.mrb[0].mxu0 %v1985
      %v2082 = vpop.f32.mrb[0].mxu0
      %v2083 = vadd.f32 0.0, %v2082
      %v2084 = vpop.f32.mrb[0].mxu0
      %2085 = vmatprep.mubr.f32.mxu0 0.0
      %2086 = vmatmul.mubr.f32.gmra.mrb[0].mxu0 %v1988
      %v2087 = vpop.f32.mrb[0].mxu0
      %v2088 = vadd.f32 0.0, %v2087
      %v2089 = vpop.f32.mrb[0].mxu0
      %2090 = vmatprep.mubr.f32.mxu0 0.0
      %2091 = vmatmul.mubr.f32.gmra.mrb[0].mxu0 %v1991
      %v2092 = vpop.f32.mrb[0].mxu0
      %v2093 = vadd.f32 0.0, %v2092
      %v2094 = vpop.f32.mrb[0].mxu0
      %2095 = vmatprep.mubr.f32.mxu0 0.0
      %2096 = vmatmul.mubr.f32.gmra.mrb[0].mxu0 %v1994
      %v2097 = vpop.f32.mrb[0].mxu0
      %v2098 = vadd.f32 0.0, %v2097
      %v2099 = vpop.f32.mrb[0].mxu0
      %2100 = vdwg.mxu0
      %v2102 = vsel %vm744, %v2063, 0
      %v2105 = vsel %vm744, %v2068, 0
      %v2108 = vsel %vm744, %v2073, 0
      %v2111 = vsel %vm744, %v2078, 0
      %v2114 = vsel %vm744, %v2083, 0
      %v2117 = vsel %vm744, %v2088, 0
      %v2120 = vsel %vm744, %v2093, 0
      %v2123 = vsel %vm744, %v2098, 0
      %2125 = vmatprep.subr.mxu0 0.0
      %2126 = vmatpush1.msra.mxu0 %v742
      %2127 = vmatprep.subr.mxu0 0.0
      %2128 = vmatpush1.msra.mxu0 0.0
      %2129 = vmatprep.subr.mxu0 0.0
      %2130 = vmatpush1.msra.mxu0 0.0
      %2131 = vmatprep.subr.mxu0 0.0
      %2132 = vmatpush1.msra.mxu0 0.0
      %2133 = vmatprep.subr.mxu0 0.0
      %2134 = vmatpush1.msra.mxu0 0.0
      %2135 = vmatprep.subr.mxu0 0.0
      %2136 = vmatpush1.msra.mxu0 0.0
      %2137 = vmatprep.subr.mxu0 0.0
      %2138 = vmatpush1.msra.mxu0 0.0
      %2139 = vmatprep.subr.mxu0 0.0
      %2140 = vmatpush1.msra.mxu0 0.0
      %2141 = vmatprep.subr.mxu0 0.0
      %2142 = vmatpush1.msra.mxu0 0.0
      %2143 = vmatprep.subr.mxu0 0.0
      %2144 = vmatpush1.msra.mxu0 0.0
      %2145 = vmatprep.subr.mxu0 0.0
      %2146 = vmatpush1.msra.mxu0 0.0
      %2147 = vmatprep.subr.mxu0 0.0
      %2148 = vmatpush1.msra.mxu0 0.0
      %2149 = vmatprep.subr.mxu0 0.0
      %2150 = vmatpush1.msra.mxu0 0.0
      %2151 = vmatprep.subr.mxu0 0.0
      %2152 = vmatpush1.msra.mxu0 0.0
      %2153 = vmatprep.subr.mxu0 0.0
      %2154 = vmatpush1.msra.mxu0 0.0
      %2155 = vmatprep.subr.mxu0 0.0
      %2156 = vmatpush1.msra.mxu0 0.0
      %2157 = vmatprep.subr.mxu0 0.0
      %2158 = vmatpush1.msra.mxu0 0.0
      %2159 = vmatprep.subr.mxu0 0.0
      %2160 = vmatpush1.msra.mxu0 0.0
      %2161 = vmatprep.subr.mxu0 0.0
      %2162 = vmatpush1.msra.mxu0 0.0
      %2163 = vmatprep.subr.mxu0 0.0
      %2164 = vmatpush1.msra.mxu0 0.0
      %2165 = vmatprep.subr.mxu0 0.0
      %2166 = vmatpush1.msra.mxu0 0.0
      %2167 = vmatprep.subr.mxu0 0.0
      %2168 = vmatpush1.msra.mxu0 0.0
      %2169 = vmatprep.subr.mxu0 0.0
      %2170 = vmatpush1.msra.mxu0 0.0
      %2171 = vmatprep.subr.mxu0 0.0
      %2172 = vmatpush1.msra.mxu0 0.0
      %2173 = vmatprep.subr.mxu0 0.0
      %2174 = vmatpush1.msra.mxu0 0.0
      %2175 = vmatprep.subr.mxu0 0.0
      %2176 = vmatpush1.msra.mxu0 0.0
      %2177 = vmatprep.subr.mxu0 0.0
      %2178 = vmatpush1.msra.mxu0 0.0
      %2179 = vmatprep.subr.mxu0 0.0
      %2180 = vmatpush1.msra.mxu0 0.0
      %2181 = vmatprep.subr.mxu0 0.0
      %2182 = vmatpush1.msra.mxu0 0.0
      %2183 = vmatprep.subr.mxu0 0.0
      %2184 = vmatpush1.msra.mxu0 0.0
      %2185 = vmatprep.subr.mxu0 0.0
      %2186 = vmatpush1.msra.mxu0 0.0
      %2187 = vmatprep.subr.mxu0 0.0
      %2188 = vmatpush1.msra.mxu0 0.0
      %2189 = vmatprep.mubr.f32.mxu0 0.0
      %2190 = vmatmul.mubr.f32.gmra.mrb[0].mxu0 %v2102
      %v2191 = vpop.f32.mrb[0].mxu0
      %v2192 = vadd.f32 0.0, %v2191
      %v2193 = vpop.f32.mrb[0].mxu0
      %2194 = vmatprep.mubr.f32.mxu0 0.0
      %2195 = vmatmul.mubr.f32.gmra.mrb[0].mxu0 %v2105
      %v2196 = vpop.f32.mrb[0].mxu0
      %v2197 = vadd.f32 0.0, %v2196
      %v2198 = vpop.f32.mrb[0].mxu0
      %2199 = vmatprep.mubr.f32.mxu0 0.0
      %2200 = vmatmul.mubr.f32.gmra.mrb[0].mxu0 %v2108
      %v2201 = vpop.f32.mrb[0].mxu0
      %v2202 = vadd.f32 0.0, %v2201
      %v2203 = vpop.f32.mrb[0].mxu0
      %2204 = vmatprep.mubr.f32.mxu0 0.0
      %2205 = vmatmul.mubr.f32.gmra.mrb[0].mxu0 %v2111
      %v2206 = vpop.f32.mrb[0].mxu0
      %v2207 = vadd.f32 0.0, %v2206
      %v2208 = vpop.f32.mrb[0].mxu0
      %2209 = vmatprep.mubr.f32.mxu0 0.0
      %2210 = vmatmul.mubr.f32.gmra.mrb[0].mxu0 %v2114
      %v2211 = vpop.f32.mrb[0].mxu0
      %v2212 = vadd.f32 0.0, %v2211
      %v2213 = vpop.f32.mrb[0].mxu0
      %2214 = vmatprep.mubr.f32.mxu0 0.0
      %2215 = vmatmul.mubr.f32.gmra.mrb[0].mxu0 %v2117
      %v2216 = vpop.f32.mrb[0].mxu0
      %v2217 = vadd.f32 0.0, %v2216
      %v2218 = vpop.f32.mrb[0].mxu0
      %2219 = vmatprep.mubr.f32.mxu0 0.0
      %2220 = vmatmul.mubr.f32.gmra.mrb[0].mxu0 %v2120
      %v2221 = vpop.f32.mrb[0].mxu0
      %v2222 = vadd.f32 0.0, %v2221
      %v2223 = vpop.f32.mrb[0].mxu0
      %2224 = vmatprep.mubr.f32.mxu0 0.0
      %2225 = vmatmul.mubr.f32.gmra.mrb[0].mxu0 %v2123
      %v2226 = vpop.f32.mrb[0].mxu0
      %v2227 = vadd.f32 0.0, %v2226
      %v2228 = vpop.f32.mrb[0].mxu0
      %2229 = vdwg.mxu0
      %v2230 = vadd.f32 %v1694, %v2192
      %v2231 = vadd.f32 %v1699, %v2197
      %v2232 = vadd.f32 %v1704, %v2202
      %v2233 = vadd.f32 %v1709, %v2207
      %v2234 = vadd.f32 %v1714, %v2212
      %v2235 = vadd.f32 %v1719, %v2217
      %v2236 = vadd.f32 %v1724, %v2222
      %v2237 = vadd.f32 %v1729, %v2227
      %2238 = vrot.lane.b32.xlu0 %v484, 104
      %v2239 = vpop.permute.xlu0 %2238
      %2240 = vrot.lane.b32.xlu0 %v489, 104
      %v2241 = vpop.permute.xlu0 %2240
      %2242 = vrot.lane.b32.xlu0 %v494, 104
      %v2243 = vpop.permute.xlu0 %2242
      %2244 = vrot.lane.b32.xlu0 %v499, 104
      %v2245 = vpop.permute.xlu0 %2244
      %2246 = vrot.lane.b32.xlu0 %v504, 104
      %v2247 = vpop.permute.xlu0 %2246
      %2248 = vrot.lane.b32.xlu0 %v509, 104
      %v2249 = vpop.permute.xlu0 %2248
      %2250 = vrot.lane.b32.xlu0 %v514, 104
      %v2251 = vpop.permute.xlu0 %2250
      %2252 = vrot.lane.b32.xlu0 %v519, 104
      %v2253 = vpop.permute.xlu0 %2252
      %2254 = vrot.lane.b32.xlu0 %v737, 104
      %v2255 = vpop.permute.xlu0 %2254
      %v2256 = vsel %vm744, %v2239, 0
      %v2258 = vsel %vm744, %v2241, 0
      %v2260 = vsel %vm744, %v2243, 0
      %v2262 = vsel %vm744, %v2245, 0
      %v2264 = vsel %vm744, %v2247, 0
      %v2266 = vsel %vm744, %v2249, 0
      %v2268 = vsel %vm744, %v2251, 0
      %v2270 = vsel %vm744, %v2253, 0
      %v2272 = vsel %vm744, %v2255, 0
      %2274 = vmatprep.subr.mxu0 0.0
      %2275 = vmatpush1.xpose.msra.mxu0 %v2272
      %2276 = vmatprep.subr.mxu0 0.0
      %2277 = vmatpush1.xpose.msra.mxu0 0.0
      %2278 = vmatprep.subr.mxu0 0.0
      %2279 = vmatpush1.xpose.msra.mxu0 0.0
      %2280 = vmatprep.subr.mxu0 0.0
      %2281 = vmatpush1.xpose.msra.mxu0 0.0
      %2282 = vmatprep.subr.mxu0 0.0
      %2283 = vmatpush1.xpose.msra.mxu0 0.0
      %2284 = vmatprep.subr.mxu0 0.0
      %2285 = vmatpush1.xpose.msra.mxu0 0.0
      %2286 = vmatprep.subr.mxu0 0.0
      %2287 = vmatpush1.xpose.msra.mxu0 0.0
      %2288 = vmatprep.subr.mxu0 0.0
      %2289 = vmatpush1.xpose.msra.mxu0 0.0
      %2290 = vmatprep.subr.mxu0 0.0
      %2291 = vmatpush1.xpose.msra.mxu0 0.0
      %2292 = vmatprep.subr.mxu0 0.0
      %2293 = vmatpush1.xpose.msra.mxu0 0.0
      %2294 = vmatprep.subr.mxu0 0.0
      %2295 = vmatpush1.xpose.msra.mxu0 0.0
      %2296 = vmatprep.subr.mxu0 0.0
      %2297 = vmatpush1.xpose.msra.mxu0 0.0
      %2298 = vmatprep.subr.mxu0 0.0
      %2299 = vmatpush1.xpose.msra.mxu0 0.0
      %2300 = vmatprep.subr.mxu0 0.0
      %2301 = vmatpush1.xpose.msra.mxu0 0.0
      %2302 = vmatprep.subr.mxu0 0.0
      %2303 = vmatpush1.xpose.msra.mxu0 0.0
      %2304 = vmatprep.subr.mxu0 0.0
      %2305 = vmatpush1.xpose.msra.mxu0 0.0
      %2306 = vmatprep.subr.mxu0 0.0
      %2307 = vmatpush1.xpose.msra.mxu0 0.0
      %2308 = vmatprep.subr.mxu0 0.0
      %2309 = vmatpush1.xpose.msra.mxu0 0.0
      %2310 = vmatprep.subr.mxu0 0.0
      %2311 = vmatpush1.xpose.msra.mxu0 0.0
      %2312 = vmatprep.subr.mxu0 0.0
      %2313 = vmatpush1.xpose.msra.mxu0 0.0
      %2314 = vmatprep.subr.mxu0 0.0
      %2315 = vmatpush1.xpose.msra.mxu0 0.0
      %2316 = vmatprep.subr.mxu0 0.0
      %2317 = vmatpush1.xpose.msra.mxu0 0.0
      %2318 = vmatprep.subr.mxu0 0.0
      %2319 = vmatpush1.xpose.msra.mxu0 0.0
      %2320 = vmatprep.subr.mxu0 0.0
      %2321 = vmatpush1.xpose.msra.mxu0 0.0
      %2322 = vmatprep.subr.mxu0 0.0
      %2323 = vmatpush1.xpose.msra.mxu0 0.0
      %2324 = vmatprep.subr.mxu0 0.0
      %2325 = vmatpush1.xpose.msra.mxu0 0.0
      %2326 = vmatprep.subr.mxu0 0.0
      %2327 = vmatpush1.xpose.msra.mxu0 0.0
      %2328 = vmatprep.subr.mxu0 0.0
      %2329 = vmatpush1.xpose.msra.mxu0 0.0
      %2330 = vmatprep.subr.mxu0 0.0
      %2331 = vmatpush1.xpose.msra.mxu0 0.0
      %2332 = vmatprep.subr.mxu0 0.0
      %2333 = vmatpush1.xpose.msra.mxu0 0.0
      %2334 = vmatprep.subr.mxu0 0.0
      %2335 = vmatpush1.xpose.msra.mxu0 0.0
      %2336 = vmatprep.subr.mxu0 0.0
      %2337 = vmatpush1.xpose.msra.mxu0 0.0
      %2338 = vmatprep.mubr.f32.mxu0 0.0
      %2339 = vmatmul.mubr.f32.gmra.mrb[0].mxu0 %v2256
      %v2340 = vpop.f32.mrb[0].mxu0
      %v2341 = vadd.f32 0.0, %v2340
      %v2342 = vpop.f32.mrb[0].mxu0
      %2343 = vmatprep.mubr.f32.mxu0 0.0
      %2344 = vmatmul.mubr.f32.gmra.mrb[0].mxu0 %v2258
      %v2345 = vpop.f32.mrb[0].mxu0
      %v2346 = vadd.f32 0.0, %v2345
      %v2347 = vpop.f32.mrb[0].mxu0
      %2348 = vmatprep.mubr.f32.mxu0 0.0
      %2349 = vmatmul.mubr.f32.gmra.mrb[0].mxu0 %v2260
      %v2350 = vpop.f32.mrb[0].mxu0
      %v2351 = vadd.f32 0.0, %v2350
      %v2352 = vpop.f32.mrb[0].mxu0
      %2353 = vmatprep.mubr.f32.mxu0 0.0
      %2354 = vmatmul.mubr.f32.gmra.mrb[0].mxu0 %v2262
      %v2355 = vpop.f32.mrb[0].mxu0
      %v2356 = vadd.f32 0.0, %v2355
      %v2357 = vpop.f32.mrb[0].mxu0
      %2358 = vmatprep.mubr.f32.mxu0 0.0
      %2359 = vmatmul.mubr.f32.gmra.mrb[0].mxu0 %v2264
      %v2360 = vpop.f32.mrb[0].mxu0
      %v2361 = vadd.f32 0.0, %v2360
      %v2362 = vpop.f32.mrb[0].mxu0
      %2363 = vmatprep.mubr.f32.mxu0 0.0
      %2364 = vmatmul.mubr.f32.gmra.mrb[0].mxu0 %v2266
      %v2365 = vpop.f32.mrb[0].mxu0
      %v2366 = vadd.f32 0.0, %v2365
      %v2367 = vpop.f32.mrb[0].mxu0
      %2368 = vmatprep.mubr.f32.mxu0 0.0
      %2369 = vmatmul.mubr.f32.gmra.mrb[0].mxu0 %v2268
      %v2370 = vpop.f32.mrb[0].mxu0
      %v2371 = vadd.f32 0.0, %v2370
      %v2372 = vpop.f32.mrb[0].mxu0
      %2373 = vmatprep.mubr.f32.mxu0 0.0
      %2374 = vmatmul.mubr.f32.gmra.mrb[0].mxu0 %v2270
      %v2375 = vpop.f32.mrb[0].mxu0
      %v2376 = vadd.f32 0.0, %v2375
      %v2377 = vpop.f32.mrb[0].mxu0
      %2378 = vdwg.mxu0
      %v2379 = vmul.f32 %v2341, 0.5
      %v2380 = vmul.f32 %v2346, 0.5
      %v2381 = vmul.f32 %v2351, 0.5
      %v2382 = vmul.f32 %v2356, 0.5
      %v2383 = vmul.f32 %v2361, 0.5
      %v2384 = vmul.f32 %v2366, 0.5
      %v2385 = vmul.f32 %v2371, 0.5
      %v2386 = vmul.f32 %v2376, 0.5
      %v2387 = vsel %vm744, %v2379, -inf
      %2388 = vmax.xlane.f32.xlu0 %v2387
      %v2389 = vpop.xlane.xlu0 %2388
      %v2390 = vsel %vm744, %v2380, -inf
      %2391 = vmax.xlane.f32.xlu0 %v2390
      %v2392 = vpop.xlane.xlu0 %2391
      %v2393 = vsel %vm744, %v2381, -inf
      %2394 = vmax.xlane.f32.xlu0 %v2393
      %v2395 = vpop.xlane.xlu0 %2394
      %v2396 = vsel %vm744, %v2382, -inf
      %2397 = vmax.xlane.f32.xlu0 %v2396
      %v2398 = vpop.xlane.xlu0 %2397
      %v2399 = vsel %vm744, %v2383, -inf
      %2400 = vmax.xlane.f32.xlu0 %v2399
      %v2401 = vpop.xlane.xlu0 %2400
      %v2402 = vsel %vm744, %v2384, -inf
      %2403 = vmax.xlane.f32.xlu0 %v2402
      %v2404 = vpop.xlane.xlu0 %2403
      %v2405 = vsel %vm744, %v2385, -inf
      %2406 = vmax.xlane.f32.xlu0 %v2405
      %v2407 = vpop.xlane.xlu0 %2406
      %v2408 = vsel %vm744, %v2386, -inf
      %2409 = vmax.xlane.f32.xlu0 %v2408
      %v2410 = vpop.xlane.xlu0 %2409
      %v2411 = vsub.f32 %v2379, %v2389
      %v2412 = vsub.f32 %v2380, %v2392
      %v2413 = vsub.f32 %v2381, %v2395
      %v2414 = vsub.f32 %v2382, %v2398
      %v2415 = vsub.f32 %v2383, %v2401
      %v2416 = vsub.f32 %v2384, %v2404
      %v2417 = vsub.f32 %v2385, %v2407
      %v2418 = vsub.f32 %v2386, %v2410
      %v2419 = vmul.f32 %v2411, 1.442695
      %v2420 = vpow.pop %v2419
      %v2421 = vmul.f32 %v2412, 1.442695
      %v2422 = vpow.pop %v2421
      %v2423 = vmul.f32 %v2413, 1.442695
      %v2424 = vpow.pop %v2423
      %v2425 = vmul.f32 %v2414, 1.442695
      %v2426 = vpow.pop %v2425
      %v2427 = vmul.f32 %v2415, 1.442695
      %v2428 = vpow.pop %v2427
      %v2429 = vmul.f32 %v2416, 1.442695
      %v2430 = vpow.pop %v2429
      %v2431 = vmul.f32 %v2417, 1.442695
      %v2432 = vpow.pop %v2431
      %v2433 = vmul.f32 %v2418, 1.442695
      %v2434 = vpow.pop %v2433
      %v2435 = vsel %vm744, %v2420, 0.0
      %2436 = vadd.xlane.f32.xlu0 %v2435
      %v2437 = vpop.xlane.xlu0 %2436
      %v2438 = vsel %vm744, %v2422, 0.0
      %2439 = vadd.xlane.f32.xlu0 %v2438
      %v2440 = vpop.xlane.xlu0 %2439
      %v2441 = vsel %vm744, %v2424, 0.0
      %2442 = vadd.xlane.f32.xlu0 %v2441
      %v2443 = vpop.xlane.xlu0 %2442
      %v2444 = vsel %vm744, %v2426, 0.0
      %2445 = vadd.xlane.f32.xlu0 %v2444
      %v2446 = vpop.xlane.xlu0 %2445
      %v2447 = vsel %vm744, %v2428, 0.0
      %2448 = vadd.xlane.f32.xlu0 %v2447
      %v2449 = vpop.xlane.xlu0 %2448
      %v2450 = vsel %vm744, %v2430, 0.0
      %2451 = vadd.xlane.f32.xlu0 %v2450
      %v2452 = vpop.xlane.xlu0 %2451
      %v2453 = vsel %vm744, %v2432, 0.0
      %2454 = vadd.xlane.f32.xlu0 %v2453
      %v2455 = vpop.xlane.xlu0 %2454
      %v2456 = vsel %vm744, %v2434, 0.0
      %2457 = vadd.xlane.f32.xlu0 %v2456
      %v2458 = vpop.xlane.xlu0 %2457
      %v2459 = vrcp.pop %v2437
      %v2460 = vrcp.pop %v2440
      %v2461 = vrcp.pop %v2443
      %v2462 = vrcp.pop %v2446
      %v2463 = vrcp.pop %v2449
      %v2464 = vrcp.pop %v2452
      %v2465 = vrcp.pop %v2455
      %v2466 = vrcp.pop %v2458
      %v2467 = vmul.f32 %v2420, %v2459
      %v2468 = vmul.f32 %v2422, %v2460
      %v2469 = vmul.f32 %v2424, %v2461
      %v2470 = vmul.f32 %v2426, %v2462
      %v2471 = vmul.f32 %v2428, %v2463
      %v2472 = vmul.f32 %v2430, %v2464
      %v2473 = vmul.f32 %v2432, %v2465
      %v2474 = vmul.f32 %v2434, %v2466
      %2475 = vrot.lane.b32.xlu0 %v737, 72
      %v2476 = vpop.permute.xlu0 %2475
      %v2479 = vsel %vm744, %v2467, 0
      %v2482 = vsel %vm744, %v2468, 0
      %v2485 = vsel %vm744, %v2469, 0
      %v2488 = vsel %vm744, %v2470, 0
      %v2491 = vsel %vm744, %v2471, 0
      %v2494 = vsel %vm744, %v2472, 0
      %v2497 = vsel %vm744, %v2473, 0
      %v2500 = vsel %vm744, %v2474, 0
      %2502 = vmatprep.subr.mxu0 0.0
      %2503 = vmatpush1.msra.mxu0 %v2476
      %2504 = vmatprep.subr.mxu0 0.0
      %2505 = vmatpush1.msra.mxu0 0.0
      %2506 = vmatprep.subr.mxu0 0.0
      %2507 = vmatpush1.msra.mxu0 0.0
      %2508 = vmatprep.subr.mxu0 0.0
      %2509 = vmatpush1.msra.mxu0 0.0
      %2510 = vmatprep.subr.mxu0 0.0
      %2511 = vmatpush1.msra.mxu0 0.0
      %2512 = vmatprep.subr.mxu0 0.0
      %2513 = vmatpush1.msra.mxu0 0.0
      %2514 = vmatprep.subr.mxu0 0.0
      %2515 = vmatpush1.msra.mxu0 0.0
      %2516 = vmatprep.subr.mxu0 0.0
      %2517 = vmatpush1.msra.mxu0 0.0
      %2518 = vmatprep.subr.mxu0 0.0
      %2519 = vmatpush1.msra.mxu0 0.0
      %2520 = vmatprep.subr.mxu0 0.0
      %2521 = vmatpush1.msra.mxu0 0.0
      %2522 = vmatprep.subr.mxu0 0.0
      %2523 = vmatpush1.msra.mxu0 0.0
      %2524 = vmatprep.subr.mxu0 0.0
      %2525 = vmatpush1.msra.mxu0 0.0
      %2526 = vmatprep.subr.mxu0 0.0
      %2527 = vmatpush1.msra.mxu0 0.0
      %2528 = vmatprep.subr.mxu0 0.0
      %2529 = vmatpush1.msra.mxu0 0.0
      %2530 = vmatprep.subr.mxu0 0.0
      %2531 = vmatpush1.msra.mxu0 0.0
      %2532 = vmatprep.subr.mxu0 0.0
      %2533 = vmatpush1.msra.mxu0 0.0
      %2534 = vmatprep.subr.mxu0 0.0
      %2535 = vmatpush1.msra.mxu0 0.0
      %2536 = vmatprep.subr.mxu0 0.0
      %2537 = vmatpush1.msra.mxu0 0.0
      %2538 = vmatprep.subr.mxu0 0.0
      %2539 = vmatpush1.msra.mxu0 0.0
      %2540 = vmatprep.subr.mxu0 0.0
      %2541 = vmatpush1.msra.mxu0 0.0
      %2542 = vmatprep.subr.mxu0 0.0
      %2543 = vmatpush1.msra.mxu0 0.0
      %2544 = vmatprep.subr.mxu0 0.0
      %2545 = vmatpush1.msra.mxu0 0.0
      %2546 = vmatprep.subr.mxu0 0.0
      %2547 = vmatpush1.msra.mxu0 0.0
      %2548 = vmatprep.subr.mxu0 0.0
      %2549 = vmatpush1.msra.mxu0 0.0
      %2550 = vmatprep.subr.mxu0 0.0
      %2551 = vmatpush1.msra.mxu0 0.0
      %2552 = vmatprep.subr.mxu0 0.0
      %2553 = vmatpush1.msra.mxu0 0.0
      %2554 = vmatprep.subr.mxu0 0.0
      %2555 = vmatpush1.msra.mxu0 0.0
      %2556 = vmatprep.subr.mxu0 0.0
      %2557 = vmatpush1.msra.mxu0 0.0
      %2558 = vmatprep.subr.mxu0 0.0
      %2559 = vmatpush1.msra.mxu0 0.0
      %2560 = vmatprep.subr.mxu0 0.0
      %2561 = vmatpush1.msra.mxu0 0.0
      %2562 = vmatprep.subr.mxu0 0.0
      %2563 = vmatpush1.msra.mxu0 0.0
      %2564 = vmatprep.subr.mxu0 0.0
      %2565 = vmatpush1.msra.mxu0 0.0
      %2566 = vmatprep.mubr.f32.mxu0 0.0
      %2567 = vmatmul.mubr.f32.gmra.mrb[0].mxu0 %v2479
      %v2568 = vpop.f32.mrb[0].mxu0
      %v2569 = vadd.f32 0.0, %v2568
      %v2570 = vpop.f32.mrb[0].mxu0
      %2571 = vmatprep.mubr.f32.mxu0 0.0
      %2572 = vmatmul.mubr.f32.gmra.mrb[0].mxu0 %v2482
      %v2573 = vpop.f32.mrb[0].mxu0
      %v2574 = vadd.f32 0.0, %v2573
      %v2575 = vpop.f32.mrb[0].mxu0
      %2576 = vmatprep.mubr.f32.mxu0 0.0
      %2577 = vmatmul.mubr.f32.gmra.mrb[0].mxu0 %v2485
      %v2578 = vpop.f32.mrb[0].mxu0
      %v2579 = vadd.f32 0.0, %v2578
      %v2580 = vpop.f32.mrb[0].mxu0
      %2581 = vmatprep.mubr.f32.mxu0 0.0
      %2582 = vmatmul.mubr.f32.gmra.mrb[0].mxu0 %v2488
      %v2583 = vpop.f32.mrb[0].mxu0
      %v2584 = vadd.f32 0.0, %v2583
      %v2585 = vpop.f32.mrb[0].mxu0
      %2586 = vmatprep.mubr.f32.mxu0 0.0
      %2587 = vmatmul.mubr.f32.gmra.mrb[0].mxu0 %v2491
      %v2588 = vpop.f32.mrb[0].mxu0
      %v2589 = vadd.f32 0.0, %v2588
      %v2590 = vpop.f32.mrb[0].mxu0
      %2591 = vmatprep.mubr.f32.mxu0 0.0
      %2592 = vmatmul.mubr.f32.gmra.mrb[0].mxu0 %v2494
      %v2593 = vpop.f32.mrb[0].mxu0
      %v2594 = vadd.f32 0.0, %v2593
      %v2595 = vpop.f32.mrb[0].mxu0
      %2596 = vmatprep.mubr.f32.mxu0 0.0
      %2597 = vmatmul.mubr.f32.gmra.mrb[0].mxu0 %v2497
      %v2598 = vpop.f32.mrb[0].mxu0
      %v2599 = vadd.f32 0.0, %v2598
      %v2600 = vpop.f32.mrb[0].mxu0
      %2601 = vmatprep.mubr.f32.mxu0 0.0
      %2602 = vmatmul.mubr.f32.gmra.mrb[0].mxu0 %v2500
      %v2603 = vpop.f32.mrb[0].mxu0
      %v2604 = vadd.f32 0.0, %v2603
      %v2605 = vpop.f32.mrb[0].mxu0
      %2606 = vdwg.mxu0
      %v2608 = vsel %vm744, %v2569, 0
      %v2611 = vsel %vm744, %v2574, 0
      %v2614 = vsel %vm744, %v2579, 0
      %v2617 = vsel %vm744, %v2584, 0
      %v2620 = vsel %vm744, %v2589, 0
      %v2623 = vsel %vm744, %v2594, 0
      %v2626 = vsel %vm744, %v2599, 0
      %v2629 = vsel %vm744, %v2604, 0
      %2631 = vmatprep.subr.mxu0 0.0
      %2632 = vmatpush1.msra.mxu0 %v743
      %2633 = vmatprep.subr.mxu0 0.0
      %2634 = vmatpush1.msra.mxu0 0.0
      %2635 = vmatprep.subr.mxu0 0.0
      %2636 = vmatpush1.msra.mxu0 0.0
      %2637 = vmatprep.subr.mxu0 0.0
      %2638 = vmatpush1.msra.mxu0 0.0
      %2639 = vmatprep.subr.mxu0 0.0
      %2640 = vmatpush1.msra.mxu0 0.0
      %2641 = vmatprep.subr.mxu0 0.0
      %2642 = vmatpush1.msra.mxu0 0.0
      %2643 = vmatprep.subr.mxu0 0.0
      %2644 = vmatpush1.msra.mxu0 0.0
      %2645 = vmatprep.subr.mxu0 0.0
      %2646 = vmatpush1.msra.mxu0 0.0
      %2647 = vmatprep.subr.mxu0 0.0
      %2648 = vmatpush1.msra.mxu0 0.0
      %2649 = vmatprep.subr.mxu0 0.0
      %2650 = vmatpush1.msra.mxu0 0.0
      %2651 = vmatprep.subr.mxu0 0.0
      %2652 = vmatpush1.msra.mxu0 0.0
      %2653 = vmatprep.subr.mxu0 0.0
      %2654 = vmatpush1.msra.mxu0 0.0
      %2655 = vmatprep.subr.mxu0 0.0
      %2656 = vmatpush1.msra.mxu0 0.0
      %2657 = vmatprep.subr.mxu0 0.0
      %2658 = vmatpush1.msra.mxu0 0.0
      %2659 = vmatprep.subr.mxu0 0.0
      %2660 = vmatpush1.msra.mxu0 0.0
      %2661 = vmatprep.subr.mxu0 0.0
      %2662 = vmatpush1.msra.mxu0 0.0
      %2663 = vmatprep.subr.mxu0 0.0
      %2664 = vmatpush1.msra.mxu0 0.0
      %2665 = vmatprep.subr.mxu0 0.0
      %2666 = vmatpush1.msra.mxu0 0.0
      %2667 = vmatprep.subr.mxu0 0.0
      %2668 = vmatpush1.msra.mxu0 0.0
      %2669 = vmatprep.subr.mxu0 0.0
      %2670 = vmatpush1.msra.mxu0 0.0
      %2671 = vmatprep.subr.mxu0 0.0
      %2672 = vmatpush1.msra.mxu0 0.0
      %2673 = vmatprep.subr.mxu0 0.0
      %2674 = vmatpush1.msra.mxu0 0.0
      %2675 = vmatprep.subr.mxu0 0.0
      %2676 = vmatpush1.msra.mxu0 0.0
      %2677 = vmatprep.subr.mxu0 0.0
      %2678 = vmatpush1.msra.mxu0 0.0
      %2679 = vmatprep.subr.mxu0 0.0
      %2680 = vmatpush1.msra.mxu0 0.0
      %2681 = vmatprep.subr.mxu0 0.0
      %2682 = vmatpush1.msra.mxu0 0.0
      %2683 = vmatprep.subr.mxu0 0.0
      %2684 = vmatpush1.msra.mxu0 0.0
      %2685 = vmatprep.subr.mxu0 0.0
      %2686 = vmatpush1.msra.mxu0 0.0
      %2687 = vmatprep.subr.mxu0 0.0
      %2688 = vmatpush1.msra.mxu0 0.0
      %2689 = vmatprep.subr.mxu0 0.0
      %2690 = vmatpush1.msra.mxu0 0.0
      %2691 = vmatprep.subr.mxu0 0.0
      %2692 = vmatpush1.msra.mxu0 0.0
      %2693 = vmatprep.subr.mxu0 0.0
      %2694 = vmatpush1.msra.mxu0 0.0
      %2695 = vmatprep.mubr.f32.mxu0 0.0
      %2696 = vmatmul.mubr.f32.gmra.mrb[0].mxu0 %v2608
      %v2697 = vpop.f32.mrb[0].mxu0
      %v2698 = vadd.f32 0.0, %v2697
      %v2699 = vpop.f32.mrb[0].mxu0
      %2700 = vmatprep.mubr.f32.mxu0 0.0
      %2701 = vmatmul.mubr.f32.gmra.mrb[0].mxu0 %v2611
      %v2702 = vpop.f32.mrb[0].mxu0
      %v2703 = vadd.f32 0.0, %v2702
      %v2704 = vpop.f32.mrb[0].mxu0
      %2705 = vmatprep.mubr.f32.mxu0 0.0
      %2706 = vmatmul.mubr.f32.gmra.mrb[0].mxu0 %v2614
      %v2707 = vpop.f32.mrb[0].mxu0
      %v2708 = vadd.f32 0.0, %v2707
      %v2709 = vpop.f32.mrb[0].mxu0
      %2710 = vmatprep.mubr.f32.mxu0 0.0
      %2711 = vmatmul.mubr.f32.gmra.mrb[0].mxu0 %v2617
      %v2712 = vpop.f32.mrb[0].mxu0
      %v2713 = vadd.f32 0.0, %v2712
      %v2714 = vpop.f32.mrb[0].mxu0
      %2715 = vmatprep.mubr.f32.mxu0 0.0
      %2716 = vmatmul.mubr.f32.gmra.mrb[0].mxu0 %v2620
      %v2717 = vpop.f32.mrb[0].mxu0
      %v2718 = vadd.f32 0.0, %v2717
      %v2719 = vpop.f32.mrb[0].mxu0
      %2720 = vmatprep.mubr.f32.mxu0 0.0
      %2721 = vmatmul.mubr.f32.gmra.mrb[0].mxu0 %v2623
      %v2722 = vpop.f32.mrb[0].mxu0
      %v2723 = vadd.f32 0.0, %v2722
      %v2724 = vpop.f32.mrb[0].mxu0
      %2725 = vmatprep.mubr.f32.mxu0 0.0
      %2726 = vmatmul.mubr.f32.gmra.mrb[0].mxu0 %v2626
      %v2727 = vpop.f32.mrb[0].mxu0
      %v2728 = vadd.f32 0.0, %v2727
      %v2729 = vpop.f32.mrb[0].mxu0
      %2730 = vmatprep.mubr.f32.mxu0 0.0
      %2731 = vmatmul.mubr.f32.gmra.mrb[0].mxu0 %v2629
      %v2732 = vpop.f32.mrb[0].mxu0
      %v2733 = vadd.f32 0.0, %v2732
      %v2734 = vpop.f32.mrb[0].mxu0
      %2735 = vdwg.mxu0
      %v2736 = vadd.f32 %v2230, %v2698
      %v2737 = vadd.f32 %v2231, %v2703
      %v2738 = vadd.f32 %v2232, %v2708
      %v2739 = vadd.f32 %v2233, %v2713
      %v2740 = vadd.f32 %v2234, %v2718
      %v2741 = vadd.f32 %v2235, %v2723
      %v2742 = vadd.f32 %v2236, %v2728
      %v2743 = vadd.f32 %v2237, %v2733
      %v2744 = vld [vmem:[%s9] sm:$0x1]
      %v2746 = vlaneseq
      %v2747 = vshrl.u32 %v2746, 7
      %v2748 = vsub.s32 0, %v2747
      %v2749 = vrot.slane %v2744, %v2748
      %v2751 = vadd.f32 %v2736, %v2749
      %v2752 = vadd.f32 %v2737, %v2749
      %v2753 = vadd.f32 %v2738, %v2749
      %v2754 = vadd.f32 %v2739, %v2749
      %v2755 = vadd.f32 %v2740, %v2749
      %v2756 = vadd.f32 %v2741, %v2749
      %v2757 = vadd.f32 %v2742, %v2749
      %v2758 = vadd.f32 %v2743, %v2749
      %2759 = vst.msk [vmem:[%s379] sm:$0xff] %vm392, %v2751
      %2760 = vst.msk [vmem:[%s379 + $0x8] sm:$0xff] %vm392, %v2752
      %2761 = vst.msk [vmem:[%s379 + $0x10] sm:$0xff] %vm392, %v2753
      %2762 = vst.msk [vmem:[%s379 + $0x18] sm:$0xff] %vm392, %v2754
      %2763 = vst.msk [vmem:[%s379 + $0x20] sm:$0xff] %vm392, %v2755
      %2764 = vst.msk [vmem:[%s379 + $0x28] sm:$0xff] %vm392, %v2756
      %2765 = vst.msk [vmem:[%s379 + $0x30] sm:$0xff] %vm392, %v2757
      %2766 = vst.msk [vmem:[%s379 + $0x38] sm:$0xff] %vm392, %v2758
      %p2767 = scmp.lt.s32.totalorder %s21, 1
      %s2768 = scalar_select %p2767, %s21, 1
      %s2769 = smul.addr %s2768, 8
      %s2770 = smul.addr %s2769, 8
      %s2771 = scalar_lea.vmem %s10, %s2770
      // Predicated region
      $region61: #{tpu_custom_call.1} parent=59 // pred_check
        %p2772 = pneg %p259
      $region62: #{tpu_custom_call.1} parent=59 // pred_check_branch
        %2774 = sbr.rel (%p2772) target = $region64
      $region63: #{tpu_custom_call.1} parent=59 // pred_region
        _
      $region64: #{tpu_custom_call.1} parent=59 // pred_fallthru
        _
    $region60: #{tpu_custom_call.1} parent=5 // pred_fallthru
      _
    %p2775 = scmp.le.s32.totalorder 2, %s16
    // Predicated region
    $region65: #{tpu_custom_call.1} parent=5 // pred_check
      %p2776 = pneg %p2775
    $region66: #{tpu_custom_call.1} parent=5 // pred_check_branch
      %2778 = sbr.rel (%p2776) target = $region68
    $region67: #{tpu_custom_call.1} parent=5 // pred_region
      %s2779 = ssub.s32 %s16, 2
      // Predicated region
      $region69: #{tpu_custom_call.1} parent=67 // pred_check
        %p2780 = pneg %p265
      $region70: #{tpu_custom_call.1} parent=67 // pred_check_branch
        %2782 = sbr.rel (%p2780) target = $region72
      $region71: #{tpu_custom_call.1} parent=67 // pred_region
        %p2783 = scmp.lt.s32.totalorder %s22, 1
        %s2784 = scalar_select %p2783, %s22, 1
        %s2785 = smul.addr %s2784, 8
        %s2786 = smul.addr %s2785, 8
        %s2787 = scalar_lea.vmem %s10, %s2786
      $region72: #{tpu_custom_call.1} parent=67 // pred_fallthru
        _
    $region68: #{tpu_custom_call.1} parent=5 // pred_fallthru
      _
  $region6: #{tpu_custom_call.1} parent=0 // loop_footer
    %s20 = sadd.s32 1, %s16
  $region7: #{tpu_custom_call.1} parent=0 // loop_footer_branch
    %15 = sbr.rel target = $region3
  $region8: #{tpu_custom_call.1} parent=0 // loop_exit
    _

</llo_original>
